<compile_context>
chip_gen: v5e
topology: v5e:2x2
jax: 0.10.0
libtpu: 0.0.40
codegen_flags: <defaults>
</compile_context>

<pallas_src>
import functools

import jax
import jax.numpy as jnp
from jax import lax
from jax.experimental import pallas as pl
from jax.experimental.pallas import tpu as pltpu

KDW = 7                    # depthwise conv kernel size
HALO = (KDW - 1) // 2      # = 3, 'same' padding
LN_EPS = 1e-6


def _round_up(a, b):
    return ((a + b - 1) // b) * b


def _erf_poly(x):
    # Abramowitz & Stegun 7.1.26, max abs error ~1.5e-7 (matches exact erf-GELU closely).
    a1, a2, a3, a4, a5 = 0.254829592, -0.284496736, 1.421413741, -1.453152027, 1.061405429
    p = 0.3275911
    ax = jnp.abs(x)
    t = 1.0 / (1.0 + p * ax)
    poly = ((((a5 * t + a4) * t + a3) * t + a2) * t + a1) * t
    y = 1.0 - poly * jnp.exp(-ax * ax)
    return jnp.where(x >= 0, y, -y)


def _gelu_erf(x):
    return 0.5 * x * (1.0 + _erf_poly(x * 0.7071067811865476))


def _gelu_tanh(x):
    # Cheaper VALU option (tanh -> EUP); ~1e-3 abs deviation from exact GELU.
    c = 0.7978845608028654
    return 0.5 * x * (1.0 + jnp.tanh(c * (x + 0.044715 * x * x * x)))


# ------------------------------ fused kernel ------------------------------

def convnext_block_kernel(xb_ref, xl_ref, xr_ref, wdw_ref, bdw_ref,
                          lns_ref, lnb_ref, w1_ref, b1_ref, w2_ref, b2_ref,
                          g_ref, o_ref, win_ref, *, i_chunks, use_tanh_gelu):
    t = pl.program_id(1)
    n_t = pl.num_programs(1)
    t_tile = o_ref.shape[1]
    c = o_ref.shape[2]

    # --- assemble the (t_tile + 16, C) f32 window from pipelined blocks (aligned stores) ---
    # window row i  <->  input row  t*t_tile - 8 + i
    win_ref[8:8 + t_tile, :] = xb_ref[0].astype(jnp.float32)             # body
    win_ref[0:8, :] = xl_ref[0].astype(jnp.float32)                      # 8 rows before tile
    win_ref[8 + t_tile:16 + t_tile, :] = xr_ref[0].astype(jnp.float32)   # 8 rows after tile

    @pl.when(t == 0)
    def _():  # left 'same' padding: zeros beyond the sequence start
        win_ref[0:8, :] = jnp.zeros((8, c), jnp.float32)

    @pl.when(t == n_t - 1)
    def _():  # right 'same' padding: zeros beyond the sequence end
        win_ref[8 + t_tile:16 + t_tile, :] = jnp.zeros((8, c), jnp.float32)

    # --- depthwise conv1d (k=7, 'same'); output row r uses window rows r+5 .. r+11 ---
    # NOTE(v5e micro-opt): the 6 misaligned tap slices could instead be one aligned load
    # + pltpu.roll on the XLU; conv is <1% of the GEMM FLOPs so kept simple here.
    wdw = wdw_ref[...].astype(jnp.float32)                               # (KDW, C)
    y = jnp.zeros((t_tile, c), jnp.float32)
    for k in range(KDW):                                                 # static unroll, 7 taps
        y = y + win_ref[5 + k:5 + k + t_tile, :] * wdw[k:k + 1, :]
    y = y + bdw_ref[...].astype(jnp.float32)

    # --- LayerNorm / AdaLayerNorm over channels (per-batch scale & shift) ---
    mean = jnp.mean(y, axis=-1, keepdims=True)
    yc = y - mean
    var = jnp.mean(yc * yc, axis=-1, keepdims=True)
    yn = yc * lax.rsqrt(var + LN_EPS)
    yn = yn * lns_ref[0].astype(jnp.float32) + lnb_ref[0].astype(jnp.float32)

    # --- pointwise MLP: Linear -> GELU -> Linear, chunked over the intermediate dim I ---
    cdt = w1_ref.dtype                                                   # bf16 by default
    yn_c = yn.astype(cdt)
    gelu = _gelu_tanh if use_tanh_gelu else _gelu_erf
    z = jnp.zeros((t_tile, c), jnp.float32)
    for (i0, isz) in i_chunks:                                           # static unroll
        h = jnp.dot(yn_c, w1_ref[:, i0:i0 + isz], preferred_element_type=jnp.float32)
        h = gelu(h + b1_ref[:, i0:i0 + isz].astype(jnp.float32))
        z = z + jnp.dot(h.astype(cdt), w2_ref[i0:i0 + isz, :],
                        preferred_element_type=jnp.float32)
    z = z + b2_ref[...].astype(jnp.float32)
    z = z * g_ref[...].astype(jnp.float32)

    # --- layer-scale + residual; residual comes from the already-resident f32 window ---
    o_ref[0] = (z + win_ref[8:8 + t_tile, :]).astype(o_ref.dtype)


# ------------------------------ wrapper ------------------------------

def _make_i_chunks(I, i_chunk):
    if I <= i_chunk:
        return ((0, I),)
    ic = max(128, (int(i_chunk) // 128) * 128)
    return tuple((s, min(ic, I - s)) for s in range(0, I, ic))


def _vmem_limit(t_tile, C, I, max_chunk, x_bytes, w_bytes):
    weights = 2 * C * I * w_bytes + KDW * C * 4 + (I + 3 * C) * 4
    blocks = 2 * (t_tile * C * x_bytes)          # body (double buffered)
    blocks += 2 * 2 * (8 * C * x_bytes)          # halo blocks
    blocks += 2 * (t_tile * C * x_bytes)         # output
    blocks += 2 * 2 * (C * 4)                    # LN scale / shift
    scratch = (t_tile + 16) * C * 4              # window
    interm = 4 * t_tile * C * 4 + 2 * t_tile * max_chunk * 4
    est = weights + blocks + scratch + interm
    return min(64 << 20, max(32 << 20, int(1.4 * est) + (4 << 20)))


def convnext_block_forward(x_nct, params, cond_embedding_id=None, *,
                           t_tile=None, matmul_dtype=jnp.bfloat16,
                           i_chunk=512, use_tanh_gelu=False, channels_last=False):
    """x_nct: (N, C, T) like the PyTorch module (or (N, T, C) if channels_last)."""
    x = x_nct if channels_last else jnp.transpose(x_nct, (0, 2, 1))      # (B, T, C)
    B, T, C = x.shape

    if t_tile is None:
        t_tile = min(512, _round_up(T, 8))                               # v6e can go to 1024
        # keep >= 2 grid steps so a v7x TensorCore never sits idle
        while B * pl.cdiv(T, t_tile) < 2 and t_tile > 8:
            t_tile = max(8, ((t_tile // 2) // 8) * 8)
    else:
        t_tile = max(8, (int(t_tile) // 8) * 8)
        t_tile = min(t_tile, _round_up(T, 8))

    T_pad = _round_up(T, t_tile)
    if T_pad > T:                                                        # tail rounding only
        x = jnp.pad(x, ((0, 0), (0, T_pad - T), (0, 0)))
    n_t = T_pad // t_tile
    n_blk8 = t_tile // 8
    total_blk8 = T_pad // 8

    # Depthwise conv weights -> (KDW, C) tap-major; biases as (1, C)/(1, I) rows.
    w_dw = jnp.transpose(params["dw_w"][:, 0, :], (1, 0)).astype(jnp.float32)   # (KDW, C)
    b_dw = params["dw_b"].reshape(1, C).astype(jnp.float32)

    # Per-batch LayerNorm scale/shift: plain LN weight/bias or AdaLayerNorm embeddings.
    if cond_embedding_id is not None and params.get("ada_scale") is not None:
        scale = params["ada_scale"][cond_embedding_id]                   # (B, C)
        shift = params["ada_shift"][cond_embedding_id]
    else:
        scale = jnp.broadcast_to(params["ln_w"], (B, C))
        shift = jnp.broadcast_to(params["ln_b"], (B, C))
    scale = scale.reshape(B, 1, C).astype(jnp.float32)
    shift = shift.reshape(B, 1, C).astype(jnp.float32)

    w1 = jnp.transpose(params["pw1_w"], (1, 0)).astype(matmul_dtype)     # (C, I)
    b1 = params["pw1_b"].reshape(1, -1).astype(jnp.float32)
    w2 = jnp.transpose(params["pw2_w"], (1, 0)).astype(matmul_dtype)     # (I, C)
    b2 = params["pw2_b"].reshape(1, C).astype(jnp.float32)
    gamma = (params["gamma"].reshape(1, C).astype(jnp.float32)
             if params.get("gamma") is not None
             else jnp.ones((1, C), jnp.float32))                         # gamma=None -> identity
    I = w1.shape[1]

    i_chunks = _make_i_chunks(I, i_chunk)
    max_chunk = max(sz for _, sz in i_chunks)
    vmem_bytes = _vmem_limit(t_tile, C, I, max_chunk,
                             jnp.dtype(x.dtype).itemsize, jnp.dtype(matmul_dtype).itemsize)

    kernel = functools.partial(convnext_block_kernel,
                               i_chunks=i_chunks, use_tanh_gelu=use_tanh_gelu)

    out = pl.pallas_call(
        kernel,
        out_shape=jax.ShapeDtypeStruct((B, T_pad, C), x.dtype),
        grid_spec=pltpu.PrefetchScalarGridSpec(
            num_scalar_prefetch=0,
            grid=(B, n_t),
            in_specs=[
                # x body tile + the two 8-row halo blocks: all auto double-buffered.
                pl.BlockSpec((1, t_tile, C), lambda b, t: (b, t, 0)),
                pl.BlockSpec((1, 8, C),
                             lambda b, t: (b, jnp.maximum(t * n_blk8 - 1, 0), 0)),
                pl.BlockSpec((1, 8, C),
                             lambda b, t: (b, jnp.minimum((t + 1) * n_blk8, total_blk8 - 1), 0)),
                pl.BlockSpec((KDW, C), lambda b, t: (0, 0)),             # dw weights
                pl.BlockSpec((1, C), lambda b, t: (0, 0)),               # dw bias
                pl.BlockSpec((1, 1, C), lambda b, t: (b, 0, 0)),         # LN scale (per batch)
                pl.BlockSpec((1, 1, C), lambda b, t: (b, 0, 0)),         # LN shift (per batch)
                pl.BlockSpec((C, I), lambda b, t: (0, 0)),               # pwconv1 weight
                pl.BlockSpec((1, I), lambda b, t: (0, 0)),               # pwconv1 bias
                pl.BlockSpec((I, C), lambda b, t: (0, 0)),               # pwconv2 weight
                pl.BlockSpec((1, C), lambda b, t: (0, 0)),               # pwconv2 bias
                pl.BlockSpec((1, C), lambda b, t: (0, 0)),               # gamma
            ],
            out_specs=pl.BlockSpec((1, t_tile, C), lambda b, t: (b, t, 0)),
            scratch_shapes=[
                pltpu.VMEM((t_tile + 16, C), jnp.float32),               # conv halo window
            ],
        ),
        compiler_params=pltpu.CompilerParams(
            dimension_semantics=("parallel", "parallel"),
            vmem_limit_bytes=vmem_bytes),
    )(x, x, x, w_dw, b_dw, scale, shift, w1, b1, w2, b2, gamma)

    out = out[:, :T, :] if T_pad > T else out
    return out if channels_last else jnp.transpose(out, (0, 2, 1))


# --------------------- parameter init (plain JAX glue) ---------------------

def init_convnext_block_params(key, dim, intermediate_dim,
                               layer_scale_init_value=None,
                               adanorm_num_embeddings=None):
    ks = jax.random.split(key, 6)
    bd = 1.0 / (1 * KDW) ** 0.5                 # Conv1d groups=dim -> fan_in = KDW
    dw_w = jax.random.uniform(ks[0], (dim, 1, KDW), jnp.float32, -bd, bd)
    dw_b = jax.random.uniform(ks[1], (dim,), jnp.float32, -bd, bd)
    b1 = 1.0 / dim ** 0.5
    pw1_w = jax.random.uniform(ks[2], (intermediate_dim, dim), jnp.float32, -b1, b1)
    pw1_b = jax.random.uniform(ks[3], (intermediate_dim,), jnp.float32, -b1, b1)
    b2 = 1.0 / intermediate_dim ** 0.5
    pw2_w = jax.random.uniform(ks[4], (dim, intermediate_dim), jnp.float32, -b2, b2)
    pw2_b = jax.random.uniform(ks[5], (dim,), jnp.float32, -b2, b2)
    params = dict(
        dw_w=dw_w, dw_b=dw_b,
        ln_w=jnp.ones((dim,), jnp.float32), ln_b=jnp.zeros((dim,), jnp.float32),
        pw1_w=pw1_w, pw1_b=pw1_b, pw2_w=pw2_w, pw2_b=pw2_b,
        gamma=(layer_scale_init_value * jnp.ones((dim,), jnp.float32)
               if layer_scale_init_value is not None else None),
        ada_scale=None, ada_shift=None,
    )
    if adanorm_num_embeddings is not None:
        params["ada_scale"] = jnp.ones((adanorm_num_embeddings, dim), jnp.float32)
        params["ada_shift"] = jnp.zeros((adanorm_num_embeddings, dim), jnp.float32)
    return params


# --------------------------- pure-JAX reference ---------------------------

def convnext_block_ref(x_nct, params, cond_embedding_id=None):
    B, C, T = x_nct.shape
    residual = x_nct
    y = lax.conv_general_dilated(
        x_nct, params["dw_w"], window_strides=(1,), padding=[(HALO, HALO)],
        dimension_numbers=("NCH", "OIH", "NCH"), feature_group_count=C)
    y = y + params["dw_b"][None, :, None]
    y = jnp.transpose(y, (0, 2, 1))                              # (B, T, C)
    mean = jnp.mean(y, axis=-1, keepdims=True)
    var = jnp.mean((y - mean) ** 2, axis=-1, keepdims=True)
    yn = (y - mean) / jnp.sqrt(var + LN_EPS)
    if cond_embedding_id is not None and params.get("ada_scale") is not None:
        scale = params["ada_scale"][cond_embedding_id][:, None, :]
        shift = params["ada_shift"][cond_embedding_id][:, None, :]
    else:
        scale = params["ln_w"][None, None, :]
        shift = params["ln_b"][None, None, :]
    yn = yn * scale + shift
    h = yn @ params["pw1_w"].T + params["pw1_b"]
    h = jax.nn.gelu(h, approximate=False)                        # exact erf GELU
    z = h @ params["pw2_w"].T + params["pw2_b"]
    if params.get("gamma") is not None:
        z = params["gamma"] * z
    return residual + jnp.transpose(z, (0, 2, 1))


if __name__ == "__main__":
    key = jax.random.PRNGKey(0)
    k_x, k_p, k_s, k_h, k_c = jax.random.split(key, 5)

    B, dim, inter, T = 2, 128, 256, 64                 # (N, C, T) like the PyTorch module
    x = jax.random.normal(k_x, (B, dim, T), jnp.float32)

    params = init_convnext_block_params(k_p, dim, inter,
                                        layer_scale_init_value=0.1,
                                        adanorm_num_embeddings=4)

    # 1) plain LayerNorm path, T tiled into 2 blocks of 32 (halo crosses the tile seam)
    out = convnext_block_forward(x, params, cond_embedding_id=None, t_tile=32)
    out = jax.block_until_ready(out)
    ref = convnext_block_ref(x, params, cond_embedding_id=None)
    assert out.shape == (B, dim, T)
    assert float(jnp.max(jnp.abs(out - ref))) < 5e-3   # slack for bf16 MXU matmuls

    # 2) AdaLayerNorm path: per-batch conditional scale/shift (gather done in the wrapper)
    params["ada_scale"] = 1.0 + 0.1 * jax.random.normal(k_s, (4, dim), jnp.float32)
    params["ada_shift"] = 0.1 * jax.random.normal(k_h, (4, dim), jnp.float32)
    cond = jax.random.randint(k_c, (B,), 0, 4)
    out_a = convnext_block_forward(x, params, cond_embedding_id=cond, t_tile=32)
    out_a = jax.block_until_ready(out_a)
    ref_a = convnext_block_ref(x, params, cond_embedding_id=cond)
    assert float(jnp.max(jnp.abs(out_a - ref_a))) < 5e-3

    # 3) non-divisible T path (t_tile=24 -> tail pad rows exercised, then sliced off)
    out_b = convnext_block_forward(x, params, cond_embedding_id=None, t_tile=24)
    out_b = jax.block_until_ready(out_b)
    assert float(jnp.max(jnp.abs(out_b - ref))) < 5e-3

    print("KERNEL_OK")
</pallas_src>

<mosaic_0001>
module attributes {stable_mosaic.version = 11 : i64} {
  func.func @convnext_block_kernel(%arg0: i32, %arg1: i32, %arg2: memref<1x32x128xf32, #tpu.memory_space<vmem>>, %arg3: memref<1x8x128xf32, #tpu.memory_space<vmem>>, %arg4: memref<1x8x128xf32, #tpu.memory_space<vmem>>, %arg5: memref<7x128xf32, #tpu.memory_space<vmem>>, %arg6: memref<1x128xf32, #tpu.memory_space<vmem>>, %arg7: memref<1x1x128xf32, #tpu.memory_space<vmem>>, %arg8: memref<1x1x128xf32, #tpu.memory_space<vmem>>, %arg9: memref<128x256xbf16, #tpu.memory_space<vmem>>, %arg10: memref<1x256xf32, #tpu.memory_space<vmem>>, %arg11: memref<256x128xbf16, #tpu.memory_space<vmem>>, %arg12: memref<1x128xf32, #tpu.memory_space<vmem>>, %arg13: memref<1x128xf32, #tpu.memory_space<vmem>>, %arg14: memref<1x32x128xf32, #tpu.memory_space<vmem>>, %arg15: memref<48x128xf32, #tpu.memory_space<vmem>>) attributes {dimension_semantics = [#tpu.dimension_semantics<parallel>, #tpu.dimension_semantics<parallel>], iteration_bounds = array<i64: 2, 2>, scalar_prefetch = 0 : i64, scratch_operands = 1 : i64, tpu.core_type = #tpu.core_type<tc>, window_params = [{transform_indices = @transform_0, window_bounds = array<i64: 1, 32, 128>}, {transform_indices = @transform_1, window_bounds = array<i64: 1, 8, 128>}, {transform_indices = @transform_2, window_bounds = array<i64: 1, 8, 128>}, {pipeline_mode = #tpu.pipeline_mode<synchronous>, transform_indices = @transform_3, window_bounds = array<i64: 7, 128>}, {pipeline_mode = #tpu.pipeline_mode<synchronous>, transform_indices = @transform_4, window_bounds = array<i64: 1, 128>}, {transform_indices = @transform_5, window_bounds = array<i64: 1, 1, 128>}, {transform_indices = @transform_6, window_bounds = array<i64: 1, 1, 128>}, {pipeline_mode = #tpu.pipeline_mode<synchronous>, transform_indices = @transform_7, window_bounds = array<i64: 128, 256>}, {pipeline_mode = #tpu.pipeline_mode<synchronous>, transform_indices = @transform_8, window_bounds = array<i64: 1, 256>}, {pipeline_mode = #tpu.pipeline_mode<synchronous>, transform_indices = @transform_9, window_bounds = array<i64: 256, 128>}, {pipeline_mode = #tpu.pipeline_mode<synchronous>, transform_indices = @transform_10, window_bounds = array<i64: 1, 128>}, {pipeline_mode = #tpu.pipeline_mode<synchronous>, transform_indices = @transform_11, window_bounds = array<i64: 1, 128>}, {transform_indices = @transform_12, window_bounds = array<i64: 1, 32, 128>}]} {
    %c0 = arith.constant 0 : index
    %c0_0 = arith.constant 0 : index
    %c0_1 = arith.constant 0 : index
    %0 = vector.load %arg2[%c0, %c0_0, %c0_1] : memref<1x32x128xf32, #tpu.memory_space<vmem>>, vector<1x32x128xf32>
    %1 = vector.shape_cast %0 : vector<1x32x128xf32> to vector<32x128xf32>
    %c8 = arith.constant 8 : index
    %c0_2 = arith.constant 0 : index
    %2 = vector.load %arg15[%c8, %c0_2] : memref<48x128xf32, #tpu.memory_space<vmem>>, vector<32x128xf32>
    tpu.vector_store %arg15[%c8, %c0_2], %1 {strides = array<i32>} : memref<48x128xf32, #tpu.memory_space<vmem>>, vector<32x128xf32>,
    %c0_3 = arith.constant 0 : index
    %c0_4 = arith.constant 0 : index
    %c0_5 = arith.constant 0 : index
    %3 = vector.load %arg3[%c0_3, %c0_4, %c0_5] : memref<1x8x128xf32, #tpu.memory_space<vmem>>, vector<1x8x128xf32>
    %4 = vector.shape_cast %3 : vector<1x8x128xf32> to vector<8x128xf32>
    %c0_6 = arith.constant 0 : index
    %c0_7 = arith.constant 0 : index
    %5 = vector.load %arg15[%c0_6, %c0_7] : memref<48x128xf32, #tpu.memory_space<vmem>>, vector<8x128xf32>
    tpu.vector_store %arg15[%c0_6, %c0_7], %4 {strides = array<i32>} : memref<48x128xf32, #tpu.memory_space<vmem>>, vector<8x128xf32>,
    %c0_8 = arith.constant 0 : index
    %c0_9 = arith.constant 0 : index
    %c0_10 = arith.constant 0 : index
    %6 = vector.load %arg4[%c0_8, %c0_9, %c0_10] : memref<1x8x128xf32, #tpu.memory_space<vmem>>, vector<1x8x128xf32>
    %7 = vector.shape_cast %6 : vector<1x8x128xf32> to vector<8x128xf32>
    %c40 = arith.constant 40 : index
    %c0_11 = arith.constant 0 : index
    %8 = vector.load %arg15[%c40, %c0_11] : memref<48x128xf32, #tpu.memory_space<vmem>>, vector<8x128xf32>
    tpu.vector_store %arg15[%c40, %c0_11], %7 {strides = array<i32>} : memref<48x128xf32, #tpu.memory_space<vmem>>, vector<8x128xf32>,
    %c0_i32 = arith.constant 0 : i32
    %9 = arith.cmpi eq, %arg1, %c0_i32 : i32
    %10 = arith.extui %9 : i1 to i32
    %c0_i32_12 = arith.constant 0 : i32
    %11 = arith.cmpi ne, %10, %c0_i32_12 : i32
    scf.if %11 {
      %cst_70 = arith.constant 0.000000e+00 : f32
      %141 = vector.broadcast %cst_70 : f32 to vector<8x128xf32>
      %c0_71 = arith.constant 0 : index
      %c0_72 = arith.constant 0 : index
      %142 = vector.load %arg15[%c0_71, %c0_72] : memref<48x128xf32, #tpu.memory_space<vmem>>, vector<8x128xf32>
      tpu.vector_store %arg15[%c0_71, %c0_72], %141 {strides = array<i32>} : memref<48x128xf32, #tpu.memory_space<vmem>>, vector<8x128xf32>,
    } else {
    }
    %c1_i32 = arith.constant 1 : i32
    %12 = arith.cmpi eq, %arg1, %c1_i32 : i32
    %13 = arith.extui %12 : i1 to i32
    %c0_i32_13 = arith.constant 0 : i32
    %14 = arith.cmpi ne, %13, %c0_i32_13 : i32
    scf.if %14 {
      %cst_70 = arith.constant 0.000000e+00 : f32
      %141 = vector.broadcast %cst_70 : f32 to vector<8x128xf32>
      %c40_71 = arith.constant 40 : index
      %c0_72 = arith.constant 0 : index
      %142 = vector.load %arg15[%c40_71, %c0_72] : memref<48x128xf32, #tpu.memory_space<vmem>>, vector<8x128xf32>
      tpu.vector_store %arg15[%c40_71, %c0_72], %141 {strides = array<i32>} : memref<48x128xf32, #tpu.memory_space<vmem>>, vector<8x128xf32>,
    } else {
    }
    %c0_14 = arith.constant 0 : index
    %c0_15 = arith.constant 0 : index
    %15 = vector.load %arg5[%c0_14, %c0_15] : memref<7x128xf32, #tpu.memory_space<vmem>>, vector<7x128xf32>
    %cst = arith.constant 0.000000e+00 : f32
    %16 = vector.broadcast %cst : f32 to vector<32x128xf32>
    %c5 = arith.constant 5 : index
    %c0_16 = arith.constant 0 : index
    %17 = vector.load %arg15[%c5, %c0_16] : memref<48x128xf32, #tpu.memory_space<vmem>>, vector<32x128xf32>
    %18 = vector.extract_strided_slice %15 {offsets = [0, 0], sizes = [1, 128], strides = [1, 1]} : vector<7x128xf32> to vector<1x128xf32>
    %19 = vector.broadcast %18 : vector<1x128xf32> to vector<32x128xf32>
    %20 = arith.mulf %17, %19 : vector<32x128xf32>
    %21 = arith.addf %16, %20 : vector<32x128xf32>
    %c6 = arith.constant 6 : index
    %c0_17 = arith.constant 0 : index
    %22 = vector.load %arg15[%c6, %c0_17] : memref<48x128xf32, #tpu.memory_space<vmem>>, vector<32x128xf32>
    %23 = vector.extract_strided_slice %15 {offsets = [1, 0], sizes = [1, 128], strides = [1, 1]} : vector<7x128xf32> to vector<1x128xf32>
    %24 = vector.broadcast %23 : vector<1x128xf32> to vector<32x128xf32>
    %25 = arith.mulf %22, %24 : vector<32x128xf32>
    %26 = arith.addf %21, %25 : vector<32x128xf32>
    %c7 = arith.constant 7 : index
    %c0_18 = arith.constant 0 : index
    %27 = vector.load %arg15[%c7, %c0_18] : memref<48x128xf32, #tpu.memory_space<vmem>>, vector<32x128xf32>
    %28 = vector.extract_strided_slice %15 {offsets = [2, 0], sizes = [1, 128], strides = [1, 1]} : vector<7x128xf32> to vector<1x128xf32>
    %29 = vector.broadcast %28 : vector<1x128xf32> to vector<32x128xf32>
    %30 = arith.mulf %27, %29 : vector<32x128xf32>
    %31 = arith.addf %26, %30 : vector<32x128xf32>
    %c8_19 = arith.constant 8 : index
    %c0_20 = arith.constant 0 : index
    %32 = vector.load %arg15[%c8_19, %c0_20] : memref<48x128xf32, #tpu.memory_space<vmem>>, vector<32x128xf32>
    %33 = vector.extract_strided_slice %15 {offsets = [3, 0], sizes = [1, 128], strides = [1, 1]} : vector<7x128xf32> to vector<1x128xf32>
    %34 = vector.broadcast %33 : vector<1x128xf32> to vector<32x128xf32>
    %35 = arith.mulf %32, %34 : vector<32x128xf32>
    %36 = arith.addf %31, %35 : vector<32x128xf32>
    %c9 = arith.constant 9 : index
    %c0_21 = arith.constant 0 : index
    %37 = vector.load %arg15[%c9, %c0_21] : memref<48x128xf32, #tpu.memory_space<vmem>>, vector<32x128xf32>
    %38 = vector.extract_strided_slice %15 {offsets = [4, 0], sizes = [1, 128], strides = [1, 1]} : vector<7x128xf32> to vector<1x128xf32>
    %39 = vector.broadcast %38 : vector<1x128xf32> to vector<32x128xf32>
    %40 = arith.mulf %37, %39 : vector<32x128xf32>
    %41 = arith.addf %36, %40 : vector<32x128xf32>
    %c10 = arith.constant 10 : index
    %c0_22 = arith.constant 0 : index
    %42 = vector.load %arg15[%c10, %c0_22] : memref<48x128xf32, #tpu.memory_space<vmem>>, vector<32x128xf32>
    %43 = vector.extract_strided_slice %15 {offsets = [5, 0], sizes = [1, 128], strides = [1, 1]} : vector<7x128xf32> to vector<1x128xf32>
    %44 = vector.broadcast %43 : vector<1x128xf32> to vector<32x128xf32>
    %45 = arith.mulf %42, %44 : vector<32x128xf32>
    %46 = arith.addf %41, %45 : vector<32x128xf32>
    %c11 = arith.constant 11 : index
    %c0_23 = arith.constant 0 : index
    %47 = vector.load %arg15[%c11, %c0_23] : memref<48x128xf32, #tpu.memory_space<vmem>>, vector<32x128xf32>
    %48 = vector.extract_strided_slice %15 {offsets = [6, 0], sizes = [1, 128], strides = [1, 1]} : vector<7x128xf32> to vector<1x128xf32>
    %49 = vector.broadcast %48 : vector<1x128xf32> to vector<32x128xf32>
    %50 = arith.mulf %47, %49 : vector<32x128xf32>
    %51 = arith.addf %46, %50 : vector<32x128xf32>
    %c0_24 = arith.constant 0 : index
    %c0_25 = arith.constant 0 : index
    %52 = vector.load %arg6[%c0_24, %c0_25] : memref<1x128xf32, #tpu.memory_space<vmem>>, vector<1x128xf32>
    %53 = vector.broadcast %52 : vector<1x128xf32> to vector<32x128xf32>
    %54 = arith.addf %51, %53 : vector<32x128xf32>
    %cst_26 = arith.constant dense<0.000000e+00> : vector<32xf32>
    %55 = vector.multi_reduction <add>, %54, %cst_26 [1] : vector<32x128xf32> to vector<32xf32>
    %56 = vector.shape_cast %55 : vector<32xf32> to vector<32x1xf32>
    %cst_27 = arith.constant 1.280000e+02 : f32
    %57 = vector.broadcast %cst_27 : f32 to vector<32x1xf32>
    %58 = arith.divf %56, %57 : vector<32x1xf32>
    %59 = vector.broadcast %58 : vector<32x1xf32> to vector<32x128xf32>
    %60 = arith.subf %54, %59 : vector<32x128xf32>
    %61 = arith.mulf %60, %60 : vector<32x128xf32>
    %cst_28 = arith.constant dense<0.000000e+00> : vector<32xf32>
    %62 = vector.multi_reduction <add>, %61, %cst_28 [1] : vector<32x128xf32> to vector<32xf32>
    %63 = vector.shape_cast %62 : vector<32xf32> to vector<32x1xf32>
    %cst_29 = arith.constant 1.280000e+02 : f32
    %64 = vector.broadcast %cst_29 : f32 to vector<32x1xf32>
    %65 = arith.divf %63, %64 : vector<32x1xf32>
    %cst_30 = arith.constant 9.99999997E-7 : f32
    %66 = vector.broadcast %cst_30 : f32 to vector<32x1xf32>
    %67 = arith.addf %65, %66 : vector<32x1xf32>
    %68 = math.rsqrt %67 : vector<32x1xf32>
    %69 = vector.broadcast %68 : vector<32x1xf32> to vector<32x128xf32>
    %70 = arith.mulf %60, %69 : vector<32x128xf32>
    %c0_31 = arith.constant 0 : index
    %c0_32 = arith.constant 0 : index
    %c0_33 = arith.constant 0 : index
    %71 = vector.load %arg7[%c0_31, %c0_32, %c0_33] : memref<1x1x128xf32, #tpu.memory_space<vmem>>, vector<1x1x128xf32>
    %72 = vector.shape_cast %71 : vector<1x1x128xf32> to vector<1x128xf32>
    %73 = vector.broadcast %72 : vector<1x128xf32> to vector<32x128xf32>
    %74 = arith.mulf %70, %73 : vector<32x128xf32>
    %c0_34 = arith.constant 0 : index
    %c0_35 = arith.constant 0 : index
    %c0_36 = arith.constant 0 : index
    %75 = vector.load %arg8[%c0_34, %c0_35, %c0_36] : memref<1x1x128xf32, #tpu.memory_space<vmem>>, vector<1x1x128xf32>
    %76 = vector.shape_cast %75 : vector<1x1x128xf32> to vector<1x128xf32>
    %77 = vector.broadcast %76 : vector<1x128xf32> to vector<32x128xf32>
    %78 = arith.addf %74, %77 : vector<32x128xf32>
    %79 = arith.truncf %78 : vector<32x128xf32> to vector<32x128xbf16>
    %cst_37 = arith.constant 0.000000e+00 : f32
    %80 = vector.broadcast %cst_37 : f32 to vector<32x128xf32>
    %c0_38 = arith.constant 0 : index
    %c0_39 = arith.constant 0 : index
    %81 = vector.load %arg9[%c0_38, %c0_39] : memref<128x256xbf16, #tpu.memory_space<vmem>>, vector<128x256xbf16>
    %cst_40 = arith.constant dense<0.000000e+00> : vector<32x256xf32>
    %82 = tpu.matmul %79, %81, %cst_40 {dimension_numbers = #tpu.dot_dimension_numbers<[1], [0], [0], [1], [0, 0, 1, 1], [], []>} : vector<32x128xbf16>, vector<128x256xbf16>, vector<32x256xf32> -> vector<32x256xf32>
    %c0_41 = arith.constant 0 : index
    %c0_42 = arith.constant 0 : index
    %83 = vector.load %arg10[%c0_41, %c0_42] : memref<1x256xf32, #tpu.memory_space<vmem>>, vector<1x256xf32>
    %84 = vector.broadcast %83 : vector<1x256xf32> to vector<32x256xf32>
    %85 = arith.addf %82, %84 : vector<32x256xf32>
    %cst_43 = arith.constant 5.000000e-01 : f32
    %86 = vector.broadcast %cst_43 : f32 to vector<32x256xf32>
    %87 = arith.mulf %86, %85 : vector<32x256xf32>
    %cst_44 = arith.constant 0.707106769 : f32
    %88 = vector.broadcast %cst_44 : f32 to vector<32x256xf32>
    %89 = arith.mulf %85, %88 : vector<32x256xf32>
    %90 = math.absf %89 : vector<32x256xf32>
    %cst_45 = arith.constant 0.327591091 : f32
    %91 = vector.broadcast %cst_45 : f32 to vector<32x256xf32>
    %92 = arith.mulf %91, %90 : vector<32x256xf32>
    %cst_46 = arith.constant 1.000000e+00 : f32
    %93 = vector.broadcast %cst_46 : f32 to vector<32x256xf32>
    %94 = arith.addf %93, %92 : vector<32x256xf32>
    %cst_47 = arith.constant 1.000000e+00 : f32
    %95 = vector.broadcast %cst_47 : f32 to vector<32x256xf32>
    %96 = arith.divf %95, %94 : vector<32x256xf32>
    %cst_48 = arith.constant 1.06140542 : f32
    %97 = vector.broadcast %cst_48 : f32 to vector<32x256xf32>
    %98 = arith.mulf %97, %96 : vector<32x256xf32>
    %cst_49 = arith.constant -1.45315206 : f32
    %99 = vector.broadcast %cst_49 : f32 to vector<32x256xf32>
    %100 = arith.addf %98, %99 : vector<32x256xf32>
    %101 = arith.mulf %100, %96 : vector<32x256xf32>
    %cst_50 = arith.constant 1.42141378 : f32
    %102 = vector.broadcast %cst_50 : f32 to vector<32x256xf32>
    %103 = arith.addf %101, %102 : vector<32x256xf32>
    %104 = arith.mulf %103, %96 : vector<32x256xf32>
    %cst_51 = arith.constant -0.284496725 : f32
    %105 = vector.broadcast %cst_51 : f32 to vector<32x256xf32>
    %106 = arith.addf %104, %105 : vector<32x256xf32>
    %107 = arith.mulf %106, %96 : vector<32x256xf32>
    %cst_52 = arith.constant 0.254829586 : f32
    %108 = vector.broadcast %cst_52 : f32 to vector<32x256xf32>
    %109 = arith.addf %107, %108 : vector<32x256xf32>
    %110 = arith.mulf %109, %96 : vector<32x256xf32>
    %cst_53 = arith.constant 0.000000e+00 : f32
    %111 = vector.broadcast %cst_53 : f32 to vector<32x256xf32>
    %112 = arith.subf %111, %90 : vector<32x256xf32>
    %113 = arith.mulf %112, %90 : vector<32x256xf32>
    %114 = math.exp %113 : vector<32x256xf32>
    %115 = arith.mulf %110, %114 : vector<32x256xf32>
    %cst_54 = arith.constant 1.000000e+00 : f32
    %116 = vector.broadcast %cst_54 : f32 to vector<32x256xf32>
    %117 = arith.subf %116, %115 : vector<32x256xf32>
    %cst_55 = arith.constant 0.000000e+00 : f32
    %118 = vector.broadcast %cst_55 : f32 to vector<32x256xf32>
    %119 = arith.cmpf oge, %89, %118 : vector<32x256xf32>
    %cst_56 = arith.constant 0.000000e+00 : f32
    %120 = vector.broadcast %cst_56 : f32 to vector<32x256xf32>
    %121 = arith.subf %120, %117 : vector<32x256xf32>
    %122 = arith.select %119, %117, %121 : vector<32x256xi1>, vector<32x256xf32>
    %cst_57 = arith.constant 1.000000e+00 : f32
    %123 = vector.broadcast %cst_57 : f32 to vector<32x256xf32>
    %124 = arith.addf %123, %122 : vector<32x256xf32>
    %125 = arith.mulf %87, %124 : vector<32x256xf32>
    %126 = arith.truncf %125 : vector<32x256xf32> to vector<32x256xbf16>
    %c0_58 = arith.constant 0 : index
    %c0_59 = arith.constant 0 : index
    %127 = vector.load %arg11[%c0_58, %c0_59] : memref<256x128xbf16, #tpu.memory_space<vmem>>, vector<256x128xbf16>
    %cst_60 = arith.constant dense<0.000000e+00> : vector<32x128xf32>
    %128 = tpu.matmul %126, %127, %cst_60 {dimension_numbers = #tpu.dot_dimension_numbers<[1], [0], [0], [1], [0, 0, 1, 1], [], []>} : vector<32x256xbf16>, vector<256x128xbf16>, vector<32x128xf32> -> vector<32x128xf32>
    %129 = arith.addf %80, %128 : vector<32x128xf32>
    %c0_61 = arith.constant 0 : index
    %c0_62 = arith.constant 0 : index
    %130 = vector.load %arg12[%c0_61, %c0_62] : memref<1x128xf32, #tpu.memory_space<vmem>>, vector<1x128xf32>
    %131 = vector.broadcast %130 : vector<1x128xf32> to vector<32x128xf32>
    %132 = arith.addf %129, %131 : vector<32x128xf32>
    %c0_63 = arith.constant 0 : index
    %c0_64 = arith.constant 0 : index
    %133 = vector.load %arg13[%c0_63, %c0_64] : memref<1x128xf32, #tpu.memory_space<vmem>>, vector<1x128xf32>
    %134 = vector.broadcast %133 : vector<1x128xf32> to vector<32x128xf32>
    %135 = arith.mulf %132, %134 : vector<32x128xf32>
    %c8_65 = arith.constant 8 : index
    %c0_66 = arith.constant 0 : index
    %136 = vector.load %arg15[%c8_65, %c0_66] : memref<48x128xf32, #tpu.memory_space<vmem>>, vector<32x128xf32>
    %137 = arith.addf %135, %136 : vector<32x128xf32>
    %c0_67 = arith.constant 0 : index
    %c0_68 = arith.constant 0 : index
    %c0_69 = arith.constant 0 : index
    %138 = vector.load %arg14[%c0_67, %c0_68, %c0_69] : memref<1x32x128xf32, #tpu.memory_space<vmem>>, vector<1x32x128xf32>
    %139 = vector.shape_cast %138 : vector<1x32x128xf32> to vector<32x128xf32>
    %140 = vector.shape_cast %137 : vector<32x128xf32> to vector<1x32x128xf32>
    tpu.vector_store %arg14[%c0_67, %c0_68, %c0_69], %140 {strides = array<i32>} : memref<1x32x128xf32, #tpu.memory_space<vmem>>, vector<1x32x128xf32>,
    return
  }
  func.func @transform_0(%arg0: i32, %arg1: i32) -> (i32, i32, i32) {
    %c0_i32 = arith.constant 0 : i32
    %c0_i32_0 = arith.constant 0 : i32
    return %arg0, %arg1, %c0_i32 : i32, i32, i32
  }
  func.func @transform_1(%arg0: i32, %arg1: i32) -> (i32, i32, i32) {
    %c4_i32 = arith.constant 4 : i32
    %0 = arith.muli %arg1, %c4_i32 : i32
    %c1_i32 = arith.constant 1 : i32
    %1 = arith.subi %0, %c1_i32 : i32
    %c0_i32 = arith.constant 0 : i32
    %2 = arith.maxsi %1, %c0_i32 : i32
    %c0_i32_0 = arith.constant 0 : i32
    %c0_i32_1 = arith.constant 0 : i32
    return %arg0, %2, %c0_i32_0 : i32, i32, i32
  }
  func.func @transform_2(%arg0: i32, %arg1: i32) -> (i32, i32, i32) {
    %c1_i32 = arith.constant 1 : i32
    %0 = arith.addi %arg1, %c1_i32 : i32
    %c4_i32 = arith.constant 4 : i32
    %1 = arith.muli %0, %c4_i32 : i32
    %c7_i32 = arith.constant 7 : i32
    %2 = arith.minsi %1, %c7_i32 : i32
    %c0_i32 = arith.constant 0 : i32
    %c0_i32_0 = arith.constant 0 : i32
    return %arg0, %2, %c0_i32 : i32, i32, i32
  }
  func.func @transform_3(%arg0: i32, %arg1: i32) -> (i32, i32) {
    %c0_i32 = arith.constant 0 : i32
    %c0_i32_0 = arith.constant 0 : i32
    %c0_i32_1 = arith.constant 0 : i32
    return %c0_i32, %c0_i32_0 : i32, i32
  }
  func.func @transform_4(%arg0: i32, %arg1: i32) -> (i32, i32) {
    %c0_i32 = arith.constant 0 : i32
    %c0_i32_0 = arith.constant 0 : i32
    %c0_i32_1 = arith.constant 0 : i32
    return %c0_i32, %c0_i32_0 : i32, i32
  }
  func.func @transform_5(%arg0: i32, %arg1: i32) -> (i32, i32, i32) {
    %c0_i32 = arith.constant 0 : i32
    %c0_i32_0 = arith.constant 0 : i32
    %c0_i32_1 = arith.constant 0 : i32
    return %arg0, %c0_i32, %c0_i32_0 : i32, i32, i32
  }
  func.func @transform_6(%arg0: i32, %arg1: i32) -> (i32, i32, i32) {
    %c0_i32 = arith.constant 0 : i32
    %c0_i32_0 = arith.constant 0 : i32
    %c0_i32_1 = arith.constant 0 : i32
    return %arg0, %c0_i32, %c0_i32_0 : i32, i32, i32
  }
  func.func @transform_7(%arg0: i32, %arg1: i32) -> (i32, i32) {
    %c0_i32 = arith.constant 0 : i32
    %c0_i32_0 = arith.constant 0 : i32
    %c0_i32_1 = arith.constant 0 : i32
    return %c0_i32, %c0_i32_0 : i32, i32
  }
  func.func @transform_8(%arg0: i32, %arg1: i32) -> (i32, i32) {
    %c0_i32 = arith.constant 0 : i32
    %c0_i32_0 = arith.constant 0 : i32
    %c0_i32_1 = arith.constant 0 : i32
    return %c0_i32, %c0_i32_0 : i32, i32
  }
  func.func @transform_9(%arg0: i32, %arg1: i32) -> (i32, i32) {
    %c0_i32 = arith.constant 0 : i32
    %c0_i32_0 = arith.constant 0 : i32
    %c0_i32_1 = arith.constant 0 : i32
    return %c0_i32, %c0_i32_0 : i32, i32
  }
  func.func @transform_10(%arg0: i32, %arg1: i32) -> (i32, i32) {
    %c0_i32 = arith.constant 0 : i32
    %c0_i32_0 = arith.constant 0 : i32
    %c0_i32_1 = arith.constant 0 : i32
    return %c0_i32, %c0_i32_0 : i32, i32
  }
  func.func @transform_11(%arg0: i32, %arg1: i32) -> (i32, i32) {
    %c0_i32 = arith.constant 0 : i32
    %c0_i32_0 = arith.constant 0 : i32
    %c0_i32_1 = arith.constant 0 : i32
    return %c0_i32, %c0_i32_0 : i32, i32
  }
  func.func @transform_12(%arg0: i32, %arg1: i32) -> (i32, i32, i32) {
    %c0_i32 = arith.constant 0 : i32
    %c0_i32_0 = arith.constant 0 : i32
    return %arg0, %arg1, %c0_i32 : i32, i32, i32
  }
}

</mosaic_0001>

<llo_original>
// kernel: tpu_custom_call.1
$region0: #{tpu_custom_call.1}
  #allocation0 [shape = 'u32[]', space=smem, size = 0x4, offset = 0x4, fixed_abs, tag = 'smem constant byte address 0x4 - core index']
  #allocation1 [shape = 'u32[72,128]{1,0:T(1,128)}', space=vmem, size = 0x9000, scoped, tag = 'internal scratch']
  #allocation2 [shape = 'f32[48,128]{1,0:T(8,128)}', space=vmem, size = 0x6000, scoped, tag = 'scratch operand']
  %s0 = inlined_call_operand.hbm [shape: f32[2,64,128], index: 0, kind: input, shape index: {}]
  %s1 = inlined_call_operand.hbm [shape: f32[2,64,128], index: 1, kind: input, shape index: {}]
  %s2 = inlined_call_operand.hbm [shape: f32[2,64,128], index: 2, kind: input, shape index: {}]
  %s3 = inlined_call_operand.hbm [shape: f32[7,128], index: 3, kind: input, shape index: {}]
  %s4 = inlined_call_operand.hbm [shape: f32[1,128], index: 4, kind: input, shape index: {}]
  %s5 = inlined_call_operand.vmem [shape: f32[2,1,128], index: 5, kind: input, shape index: {}]
  %s6 = inlined_call_operand.vmem [shape: f32[2,1,128], index: 6, kind: input, shape index: {}]
  %s7 = inlined_call_operand.hbm [shape: bf16[128,256], index: 7, kind: input, shape index: {}]
  %s8 = inlined_call_operand.vmem [shape: f32[1,256], index: 8, kind: input, shape index: {}]
  %s9 = inlined_call_operand.hbm [shape: bf16[256,128], index: 9, kind: input, shape index: {}]
  %s10 = inlined_call_operand.vmem [shape: f32[1,128], index: 10, kind: input, shape index: {}]
  %s11 = inlined_call_operand.vmem [shape: f32[1,128], index: 11, kind: input, shape index: {}]
  %s12 = inlined_call_operand.hbm [shape: f32[2,64,128], index: 12, kind: output, shape index: {}]
  %s13 = sld [smem:[#allocation0]]
  $region117: #{tpu_custom_call.1} parent=0
    _
  %s15 = ssub.s32 1, %s13
  %s16 = scalar_select 0, %s15, %s13
  $region1: #{tpu_custom_call.1} parent=0
    #allocation3 [shape = 'u8[32768]{0}', space=vmem, size = 0x8000, scoped, tag = 'input window, operand 0']
    #allocation4 [shape = 's32[2]{0}', space=sflag, size = 0x8, scoped, tag = 'scoped memory for tpu_custom_call.1']
    #allocation5 [shape = 's32[2]{0}', space=sflag, size = 0x8, scoped, tag = 'scoped memory for tpu_custom_call.1']
    #allocation6 [shape = 'u8[8192]{0}', space=vmem, size = 0x2000, scoped, tag = 'input window, operand 1']
    #allocation7 [shape = 's32[2]{0}', space=sflag, size = 0x8, scoped, tag = 'scoped memory for tpu_custom_call.1']
    #allocation8 [shape = 'u8[8192]{0}', space=vmem, size = 0x2000, scoped, tag = 'input window, operand 2']
    #allocation9 [shape = 'u8[4096]{0}', space=vmem, size = 0x1000, scoped, tag = 'input window, operand 3, single buffered']
    #allocation10 [shape = 's32[1]{0}', space=sflag, size = 0x4, scoped, tag = 'scoped memory for tpu_custom_call.1']
    #allocation11 [shape = 'u8[512]{0}', space=vmem, size = 0x400, scoped, tag = 'input window, operand 4, single buffered']
    #allocation12 [shape = 'u8[65536]{0}', space=vmem, size = 0x10000, scoped, tag = 'input window, operand 7, single buffered']
    #allocation13 [shape = 's32[1]{0}', space=sflag, size = 0x4, scoped, tag = 'scoped memory for tpu_custom_call.1']
    #allocation14 [shape = 'u8[65536]{0}', space=vmem, size = 0x10000, scoped, tag = 'input window, operand 9, single buffered']
    #allocation15 [shape = 'u8[32768]{0}', space=vmem, size = 0x8000, scoped, tag = 'output window, operand 0']
    %17 = vsyncpa [#allocation4], 0
    %s18 = scalar_lea.sflag [#allocation4], 1
    %19 = vsyncpa %s18, 0
    %20 = vsyncpa [#allocation7], 0
    %s21 = scalar_lea.sflag [#allocation7], 1
    %22 = vsyncpa %s21, 0
    %23 = vsyncpa [#allocation10], 0
    %24 = vsyncpa [#allocation13], 0
    %25 = vsyncpa [#allocation5], 0
    %s26 = scalar_lea.sflag [#allocation5], 1
    %27 = vsyncpa %s26, 0
    loop: start=0, step=1, limit=6
    $region2: #{tpu_custom_call.1} parent=1 // loop_pre_header
      _
    $region3: #{tpu_custom_call.1} parent=1 // loop_header
      %s29 = sphi 0, %s33
      %p30 = scmp.ge.s32.totalorder %s29, 6
      %s36 = sphi 0, %s48
      %s37 = sphi 0, %s44
      %s38 = sphi 0, %s36
      %s39 = sphi 0, %s37
      %s40 = sphi 0, %s38
      %s41 = sphi 0, %s39
      %s53 = sphi 0, %s55
      %s56 = sphi 0, %s53
      %s57 = sphi 0, %s56
      %s73 = sphi 0, %s57
      %s89 = sphi 0, %s91
      %s92 = sphi 0, %s89
      %s93 = sphi 0, %s92
      %s109 = sphi 0, %s93
      %s125 = sphi 0, %s127
      %s128 = sphi 0, %s125
      %s129 = sphi 0, %s128
      %s145 = sphi 0, %s129
      %s149 = sphi 0, %s149
      %s151 = sphi 0, %s149
      %s152 = sphi 0, %s151
      %s166 = sphi 0, %s152
      %s170 = sphi 0, %s170
      %s172 = sphi 0, %s170
      %s173 = sphi 0, %s172
      %s187 = sphi 0, %s173
      %s193 = sphi 0, %s195
      %s196 = sphi 0, %s193
      %s197 = sphi 0, %s196
      %s213 = sphi 0, %s197
      %s219 = sphi 0, %s221
      %s222 = sphi 0, %s219
      %s223 = sphi 0, %s222
      %s239 = sphi 0, %s223
      %s243 = sphi 0, %s243
      %s245 = sphi 0, %s243
      %s246 = sphi 0, %s245
      %s260 = sphi 0, %s246
      %s264 = sphi 0, %s264
      %s266 = sphi 0, %s264
      %s267 = sphi 0, %s266
      %s281 = sphi 0, %s267
      %s285 = sphi 0, %s285
      %s287 = sphi 0, %s285
      %s288 = sphi 0, %s287
      %s302 = sphi 0, %s288
      %s306 = sphi 0, %s306
      %s308 = sphi 0, %s306
      %s309 = sphi 0, %s308
      %s323 = sphi 0, %s309
      %s327 = sphi 0, %s327
      %s329 = sphi 0, %s327
      %s330 = sphi 0, %s329
      %s344 = sphi 0, %s330
      %s352 = sphi 0, %s354
      %s355 = sphi 0, %s352
      %s356 = sphi 0, %s355
      %s372 = sphi 0, %s356
    $region4: #{tpu_custom_call.1} parent=1 // loop_header_branch
      %32 = sbr.rel (%p30) target = $region8
    $region5: #{tpu_custom_call.1} parent=1 // loop_body
      %s34 = ssub.s32 %s29, 1
      %s35 = ssub.s32 %s29, 2
      %s42 = sadd.s32 1, %s37
      %p43 = scmp.ge.s32.totalorder %s42, 2
      %s44 = scalar_select %p43, 0, %s42
      %s45 = sadd.s32 1, %s36
      %s46 = scalar_select %p43, %s45, %s36
      %p47 = scmp.ge.s32.totalorder %s46, 2
      %s48 = scalar_select %p47, 0, %s46
      %s49 = ssub.s32 %s36, %s48
      %s50 = ssub.s32 %s37, %s44
      %s51 = sor.u32 %s49, %s50
      %p52 = scmp.eq.s32.totalorder %s51, 0
      %s54 = sadd.s32 %s53, 1
      %s55 = scalar_select %p52, %s53, %s54
      %p58 = pneg %p52
      %p59 = scmp.eq.s32.totalorder %s29, 3
      %p60 = por %p58, %p59
      %p61 = scmp.ne.s32.totalorder %s53, %s56
      %p62 = scmp.eq.s32.totalorder %s29, 0
      %p63 = por %p61, %p62
      %p64 = scmp.ne.s32.totalorder %s53, %s56
      %p65 = scmp.eq.s32.totalorder %s34, 3
      %p66 = por %p64, %p65
      %p67 = scmp.ne.s32.totalorder %s56, %s57
      %p68 = scmp.eq.s32.totalorder %s34, 0
      %p69 = por %p67, %p68
      %p70 = scmp.ne.s32.totalorder %s56, %s57
      %p71 = scmp.eq.s32.totalorder %s35, 3
      %p72 = por %p70, %p71
      %p74 = scmp.ne.s32.totalorder %s57, %s73
      %p75 = scmp.eq.s32.totalorder %s35, 0
      %p76 = por %p74, %p75
      %s77 = smul.u32 %s37, 4
      %s78 = ssub.s32 %s77, 1
      %p79 = scmp.gt.s32.totalorder %s78, 0
      %s80 = scalar_select %p79, %s78, 0
      %s81 = smul.u32 %s44, 4
      %s82 = ssub.s32 %s81, 1
      %p83 = scmp.gt.s32.totalorder %s82, 0
      %s84 = scalar_select %p83, %s82, 0
      %s85 = ssub.s32 %s36, %s48
      %s86 = ssub.s32 %s80, %s84
      %s87 = sor.u32 %s85, %s86
      %p88 = scmp.eq.s32.totalorder %s87, 0
      %s90 = sadd.s32 %s89, 1
      %s91 = scalar_select %p88, %s89, %s90
      %p94 = pneg %p88
      %p95 = scmp.eq.s32.totalorder %s29, 3
      %p96 = por %p94, %p95
      %p97 = scmp.ne.s32.totalorder %s89, %s92
      %p98 = scmp.eq.s32.totalorder %s29, 0
      %p99 = por %p97, %p98
      %p100 = scmp.ne.s32.totalorder %s89, %s92
      %p101 = scmp.eq.s32.totalorder %s34, 3
      %p102 = por %p100, %p101
      %p103 = scmp.ne.s32.totalorder %s92, %s93
      %p104 = scmp.eq.s32.totalorder %s34, 0
      %p105 = por %p103, %p104
      %p106 = scmp.ne.s32.totalorder %s92, %s93
      %p107 = scmp.eq.s32.totalorder %s35, 3
      %p108 = por %p106, %p107
      %p110 = scmp.ne.s32.totalorder %s93, %s109
      %p111 = scmp.eq.s32.totalorder %s35, 0
      %p112 = por %p110, %p111
      %s113 = sadd.s32 %s37, 1
      %s114 = smul.u32 %s113, 4
      %p115 = scmp.lt.s32.totalorder %s114, 7
      %s116 = scalar_select %p115, %s114, 7
      %s117 = sadd.s32 %s44, 1
      %s118 = smul.u32 %s117, 4
      %p119 = scmp.lt.s32.totalorder %s118, 7
      %s120 = scalar_select %p119, %s118, 7
      %s121 = ssub.s32 %s36, %s48
      %s122 = ssub.s32 %s116, %s120
      %s123 = sor.u32 %s121, %s122
      %p124 = scmp.eq.s32.totalorder %s123, 0
      %s126 = sadd.s32 %s125, 1
      %s127 = scalar_select %p124, %s125, %s126
      %p130 = pneg %p124
      %p131 = scmp.eq.s32.totalorder %s29, 3
      %p132 = por %p130, %p131
      %p133 = scmp.ne.s32.totalorder %s125, %s128
      %p134 = scmp.eq.s32.totalorder %s29, 0
      %p135 = por %p133, %p134
      %p136 = scmp.ne.s32.totalorder %s125, %s128
      %p137 = scmp.eq.s32.totalorder %s34, 3
      %p138 = por %p136, %p137
      %p139 = scmp.ne.s32.totalorder %s128, %s129
      %p140 = scmp.eq.s32.totalorder %s34, 0
      %p141 = por %p139, %p140
      %p142 = scmp.ne.s32.totalorder %s128, %s129
      %p143 = scmp.eq.s32.totalorder %s35, 3
      %p144 = por %p142, %p143
      %p146 = scmp.ne.s32.totalorder %s129, %s145
      %p147 = scmp.eq.s32.totalorder %s35, 0
      %p148 = por %p146, %p147
      %s150 = sadd.s32 %s149, 1
      %p153 = scmp.eq.s32.totalorder %s29, 3
      %p154 = scmp.ne.s32.totalorder %s149, %s151
      %p155 = scmp.eq.s32.totalorder %s29, 0
      %p156 = por %p154, %p155
      %p157 = scmp.ne.s32.totalorder %s149, %s151
      %p158 = scmp.eq.s32.totalorder %s34, 3
      %p159 = por %p157, %p158
      %p160 = scmp.ne.s32.totalorder %s151, %s152
      %p161 = scmp.eq.s32.totalorder %s34, 0
      %p162 = por %p160, %p161
      %p163 = scmp.ne.s32.totalorder %s151, %s152
      %p164 = scmp.eq.s32.totalorder %s35, 3
      %p165 = por %p163, %p164
      %p167 = scmp.ne.s32.totalorder %s152, %s166
      %p168 = scmp.eq.s32.totalorder %s35, 0
      %p169 = por %p167, %p168
      %s171 = sadd.s32 %s170, 1
      %p174 = scmp.eq.s32.totalorder %s29, 3
      %p175 = scmp.ne.s32.totalorder %s170, %s172
      %p176 = scmp.eq.s32.totalorder %s29, 0
      %p177 = por %p175, %p176
      %p178 = scmp.ne.s32.totalorder %s170, %s172
      %p179 = scmp.eq.s32.totalorder %s34, 3
      %p180 = por %p178, %p179
      %p181 = scmp.ne.s32.totalorder %s172, %s173
      %p182 = scmp.eq.s32.totalorder %s34, 0
      %p183 = por %p181, %p182
      %p184 = scmp.ne.s32.totalorder %s172, %s173
      %p185 = scmp.eq.s32.totalorder %s35, 3
      %p186 = por %p184, %p185
      %p188 = scmp.ne.s32.totalorder %s173, %s187
      %p189 = scmp.eq.s32.totalorder %s35, 0
      %p190 = por %p188, %p189
      %s191 = ssub.s32 %s36, %s48
      %p192 = scmp.eq.s32.totalorder %s191, 0
      %s194 = sadd.s32 %s193, 1
      %s195 = scalar_select %p192, %s193, %s194
      %p198 = pneg %p192
      %p199 = scmp.eq.s32.totalorder %s29, 3
      %p200 = por %p198, %p199
      %p201 = scmp.ne.s32.totalorder %s193, %s196
      %p202 = scmp.eq.s32.totalorder %s29, 0
      %p203 = por %p201, %p202
      %p204 = scmp.ne.s32.totalorder %s193, %s196
      %p205 = scmp.eq.s32.totalorder %s34, 3
      %p206 = por %p204, %p205
      %p207 = scmp.ne.s32.totalorder %s196, %s197
      %p208 = scmp.eq.s32.totalorder %s34, 0
      %p209 = por %p207, %p208
      %p210 = scmp.ne.s32.totalorder %s196, %s197
      %p211 = scmp.eq.s32.totalorder %s35, 3
      %p212 = por %p210, %p211
      %p214 = scmp.ne.s32.totalorder %s197, %s213
      %p215 = scmp.eq.s32.totalorder %s35, 0
      %p216 = por %p214, %p215
      %s217 = ssub.s32 %s36, %s48
      %p218 = scmp.eq.s32.totalorder %s217, 0
      %s220 = sadd.s32 %s219, 1
      %s221 = scalar_select %p218, %s219, %s220
      %p224 = pneg %p218
      %p225 = scmp.eq.s32.totalorder %s29, 3
      %p226 = por %p224, %p225
      %p227 = scmp.ne.s32.totalorder %s219, %s222
      %p228 = scmp.eq.s32.totalorder %s29, 0
      %p229 = por %p227, %p228
      %p230 = scmp.ne.s32.totalorder %s219, %s222
      %p231 = scmp.eq.s32.totalorder %s34, 3
      %p232 = por %p230, %p231
      %p233 = scmp.ne.s32.totalorder %s222, %s223
      %p234 = scmp.eq.s32.totalorder %s34, 0
      %p235 = por %p233, %p234
      %p236 = scmp.ne.s32.totalorder %s222, %s223
      %p237 = scmp.eq.s32.totalorder %s35, 3
      %p238 = por %p236, %p237
      %p240 = scmp.ne.s32.totalorder %s223, %s239
      %p241 = scmp.eq.s32.totalorder %s35, 0
      %p242 = por %p240, %p241
      %s244 = sadd.s32 %s243, 1
      %p247 = scmp.eq.s32.totalorder %s29, 3
      %p248 = scmp.ne.s32.totalorder %s243, %s245
      %p249 = scmp.eq.s32.totalorder %s29, 0
      %p250 = por %p248, %p249
      %p251 = scmp.ne.s32.totalorder %s243, %s245
      %p252 = scmp.eq.s32.totalorder %s34, 3
      %p253 = por %p251, %p252
      %p254 = scmp.ne.s32.totalorder %s245, %s246
      %p255 = scmp.eq.s32.totalorder %s34, 0
      %p256 = por %p254, %p255
      %p257 = scmp.ne.s32.totalorder %s245, %s246
      %p258 = scmp.eq.s32.totalorder %s35, 3
      %p259 = por %p257, %p258
      %p261 = scmp.ne.s32.totalorder %s246, %s260
      %p262 = scmp.eq.s32.totalorder %s35, 0
      %p263 = por %p261, %p262
      %s265 = sadd.s32 %s264, 1
      %p268 = scmp.eq.s32.totalorder %s29, 3
      %p269 = scmp.ne.s32.totalorder %s264, %s266
      %p270 = scmp.eq.s32.totalorder %s29, 0
      %p271 = por %p269, %p270
      %p272 = scmp.ne.s32.totalorder %s264, %s266
      %p273 = scmp.eq.s32.totalorder %s34, 3
      %p274 = por %p272, %p273
      %p275 = scmp.ne.s32.totalorder %s266, %s267
      %p276 = scmp.eq.s32.totalorder %s34, 0
      %p277 = por %p275, %p276
      %p278 = scmp.ne.s32.totalorder %s266, %s267
      %p279 = scmp.eq.s32.totalorder %s35, 3
      %p280 = por %p278, %p279
      %p282 = scmp.ne.s32.totalorder %s267, %s281
      %p283 = scmp.eq.s32.totalorder %s35, 0
      %p284 = por %p282, %p283
      %s286 = sadd.s32 %s285, 1
      %p289 = scmp.eq.s32.totalorder %s29, 3
      %p290 = scmp.ne.s32.totalorder %s285, %s287
      %p291 = scmp.eq.s32.totalorder %s29, 0
      %p292 = por %p290, %p291
      %p293 = scmp.ne.s32.totalorder %s285, %s287
      %p294 = scmp.eq.s32.totalorder %s34, 3
      %p295 = por %p293, %p294
      %p296 = scmp.ne.s32.totalorder %s287, %s288
      %p297 = scmp.eq.s32.totalorder %s34, 0
      %p298 = por %p296, %p297
      %p299 = scmp.ne.s32.totalorder %s287, %s288
      %p300 = scmp.eq.s32.totalorder %s35, 3
      %p301 = por %p299, %p300
      %p303 = scmp.ne.s32.totalorder %s288, %s302
      %p304 = scmp.eq.s32.totalorder %s35, 0
      %p305 = por %p303, %p304
      %s307 = sadd.s32 %s306, 1
      %p310 = scmp.eq.s32.totalorder %s29, 3
      %p311 = scmp.ne.s32.totalorder %s306, %s308
      %p312 = scmp.eq.s32.totalorder %s29, 0
      %p313 = por %p311, %p312
      %p314 = scmp.ne.s32.totalorder %s306, %s308
      %p315 = scmp.eq.s32.totalorder %s34, 3
      %p316 = por %p314, %p315
      %p317 = scmp.ne.s32.totalorder %s308, %s309
      %p318 = scmp.eq.s32.totalorder %s34, 0
      %p319 = por %p317, %p318
      %p320 = scmp.ne.s32.totalorder %s308, %s309
      %p321 = scmp.eq.s32.totalorder %s35, 3
      %p322 = por %p320, %p321
      %p324 = scmp.ne.s32.totalorder %s309, %s323
      %p325 = scmp.eq.s32.totalorder %s35, 0
      %p326 = por %p324, %p325
      %s328 = sadd.s32 %s327, 1
      %p331 = scmp.eq.s32.totalorder %s29, 3
      %p332 = scmp.ne.s32.totalorder %s327, %s329
      %p333 = scmp.eq.s32.totalorder %s29, 0
      %p334 = por %p332, %p333
      %p335 = scmp.ne.s32.totalorder %s327, %s329
      %p336 = scmp.eq.s32.totalorder %s34, 3
      %p337 = por %p335, %p336
      %p338 = scmp.ne.s32.totalorder %s329, %s330
      %p339 = scmp.eq.s32.totalorder %s34, 0
      %p340 = por %p338, %p339
      %p341 = scmp.ne.s32.totalorder %s329, %s330
      %p342 = scmp.eq.s32.totalorder %s35, 3
      %p343 = por %p341, %p342
      %p345 = scmp.ne.s32.totalorder %s330, %s344
      %p346 = scmp.eq.s32.totalorder %s35, 0
      %p347 = por %p345, %p346
      %s348 = ssub.s32 %s36, %s48
      %s349 = ssub.s32 %s37, %s44
      %s350 = sor.u32 %s348, %s349
      %p351 = scmp.eq.s32.totalorder %s350, 0
      %s353 = sadd.s32 %s352, 1
      %s354 = scalar_select %p351, %s352, %s353
      %p357 = pneg %p351
      %p358 = scmp.eq.s32.totalorder %s29, 3
      %p359 = por %p357, %p358
      %p360 = scmp.ne.s32.totalorder %s352, %s355
      %p361 = scmp.eq.s32.totalorder %s29, 0
      %p362 = por %p360, %p361
      %p363 = scmp.ne.s32.totalorder %s352, %s355
      %p364 = scmp.eq.s32.totalorder %s34, 3
      %p365 = por %p363, %p364
      %p366 = scmp.ne.s32.totalorder %s355, %s356
      %p367 = scmp.eq.s32.totalorder %s34, 0
      %p368 = por %p366, %p367
      %p369 = scmp.ne.s32.totalorder %s355, %s356
      %p370 = scmp.eq.s32.totalorder %s35, 3
      %p371 = por %p369, %p370
      %p373 = scmp.ne.s32.totalorder %s356, %s372
      %p374 = scmp.eq.s32.totalorder %s35, 0
      %p375 = por %p373, %p374
      %p376 = scmp.le.s32.totalorder 1, %s29
      %p377 = scmp.lt.s32.totalorder %s29, 5
      %p378 = pnand %p376, %p377
      %p379 = pneg %p378
      // Predicated region
      $region9: #{tpu_custom_call.1} parent=5 // pred_check
        _
      $region10: #{tpu_custom_call.1} parent=5 // pred_check_branch
        %381 = sbr.rel (%p378) target = $region12
      $region11: #{tpu_custom_call.1} parent=5 // pred_region
        %s382 = ssub.s32 %s29, 1
        // Predicated region
        $region13: #{tpu_custom_call.1} parent=11 // pred_check
          %p383 = pneg %p162
        $region14: #{tpu_custom_call.1} parent=11 // pred_check_branch
          %385 = sbr.rel (%p383) target = $region16
        $region15: #{tpu_custom_call.1} parent=11 // pred_region
          %387 = vsyncadd [#allocation10], 0
          %s389 = sshll.u32 %s3, 4
          %s390 = int_to_ptr.hbm [resolvable:$true] %s389
          %s391 = sshll.u32 [#allocation9], 4
          %s392 = int_to_ptr.vmem [resolvable:$true] %s391
          %394 = dma.hbm_to_vmem [thread:$0]  %s390, 128, %s392, [#allocation10]
        $region16: #{tpu_custom_call.1} parent=11 // pred_fallthru
          _
        // Predicated region
        $region17: #{tpu_custom_call.1} parent=11 // pred_check
          %p395 = pneg %p183
        $region18: #{tpu_custom_call.1} parent=11 // pred_check_branch
          %397 = sbr.rel (%p395) target = $region20
        $region19: #{tpu_custom_call.1} parent=11 // pred_region
          %399 = vsyncadd [#allocation10], 0
          %s401 = sshll.u32 %s4, 4
          %s402 = int_to_ptr.hbm [resolvable:$true] %s401
          %s403 = sshll.u32 [#allocation11], 4
          %s404 = int_to_ptr.vmem [resolvable:$true] %s403
          %406 = dma.hbm_to_vmem [thread:$0]  %s402, 16, %s404, [#allocation10]
        $region20: #{tpu_custom_call.1} parent=11 // pred_fallthru
          _
        // Predicated region
        $region21: #{tpu_custom_call.1} parent=11 // pred_check
          %p407 = pneg %p256
        $region22: #{tpu_custom_call.1} parent=11 // pred_check_branch
          %409 = sbr.rel (%p407) target = $region24
        $region23: #{tpu_custom_call.1} parent=11 // pred_region
          %411 = vsyncadd [#allocation13], 0
          %s412 = sshll.u32 %s7, 4
          %s413 = int_to_ptr.hbm [resolvable:$true] %s412
          %s414 = sshll.u32 [#allocation12], 4
          %s415 = int_to_ptr.vmem [resolvable:$true] %s414
          %420 = dma.hbm_to_vmem [thread:$0]  %s413, 2048, %s415, [#allocation13], 128, 128, 8
        $region24: #{tpu_custom_call.1} parent=11 // pred_fallthru
          _
        // Predicated region
        $region25: #{tpu_custom_call.1} parent=11 // pred_check
          %p421 = pneg %p277
        $region26: #{tpu_custom_call.1} parent=11 // pred_check_branch
          %423 = sbr.rel (%p421) target = $region28
        $region27: #{tpu_custom_call.1} parent=11 // pred_region
          _
        $region28: #{tpu_custom_call.1} parent=11 // pred_fallthru
          _
        // Predicated region
        $region29: #{tpu_custom_call.1} parent=11 // pred_check
          %p424 = pneg %p298
        $region30: #{tpu_custom_call.1} parent=11 // pred_check_branch
          %426 = sbr.rel (%p424) target = $region32
        $region31: #{tpu_custom_call.1} parent=11 // pred_region
          %428 = vsyncadd [#allocation13], 0
          %s429 = sshll.u32 %s9, 4
          %s430 = int_to_ptr.hbm [resolvable:$true] %s429
          %s431 = sshll.u32 [#allocation14], 4
          %s432 = int_to_ptr.vmem [resolvable:$true] %s431
          %437 = dma.hbm_to_vmem [thread:$0]  %s430, 2048, %s432, [#allocation13], 64, 64, 4
        $region32: #{tpu_custom_call.1} parent=11 // pred_fallthru
          _
        // Predicated region
        $region33: #{tpu_custom_call.1} parent=11 // pred_check
          %p438 = pneg %p319
        $region34: #{tpu_custom_call.1} parent=11 // pred_check_branch
          %440 = sbr.rel (%p438) target = $region36
        $region35: #{tpu_custom_call.1} parent=11 // pred_region
          _
        $region36: #{tpu_custom_call.1} parent=11 // pred_fallthru
          _
        // Predicated region
        $region37: #{tpu_custom_call.1} parent=11 // pred_check
          %p441 = pneg %p340
        $region38: #{tpu_custom_call.1} parent=11 // pred_check_branch
          %443 = sbr.rel (%p441) target = $region40
        $region39: #{tpu_custom_call.1} parent=11 // pred_region
          _
        $region40: #{tpu_custom_call.1} parent=11 // pred_fallthru
          _
      $region12: #{tpu_custom_call.1} parent=5 // pred_fallthru
        _
      %p444 = scmp.lt.s32.totalorder %s29, 4
      // Predicated region
      $region41: #{tpu_custom_call.1} parent=5 // pred_check
        %p445 = pneg %p444
      $region42: #{tpu_custom_call.1} parent=5 // pred_check_branch
        %447 = sbr.rel (%p445) target = $region44
      $region43: #{tpu_custom_call.1} parent=5 // pred_region
        // Predicated region
        $region45: #{tpu_custom_call.1} parent=43 // pred_check
          %p448 = pneg %p63
        $region46: #{tpu_custom_call.1} parent=43 // pred_check_branch
          %450 = sbr.rel (%p448) target = $region48
        $region47: #{tpu_custom_call.1} parent=43 // pred_region
          %s451 = sand.u32 %s53, 1
          %s452 = scalar_lea.sflag [#allocation4], %s451
          %s453 = sand.u32 %s53, 1
          %s454 = smul.addr %s453, 32
          %s455 = scalar_lea.vmem [#allocation3], %s454
          %s456 = smul.u32 4, %s37
          %458 = vsyncadd %s452, 0
          %s459 = smul.addr %s36, 8
          %s460 = sadd.s32 %s456, %s459
          %s461 = smul.addr %s460, 8
          %s462 = scalar_lea.hbm %s0, %s461
          %s463 = sshll.u32 %s462, 4
          %s464 = int_to_ptr.hbm [resolvable:$true] %s463
          %s465 = sshll.u32 %s455, 4
          %s466 = int_to_ptr.vmem [resolvable:$true] %s465
          %471 = dma.hbm_to_vmem [thread:$0]  %s464, 512, %s466, %s452, 128, 128, 8
        $region48: #{tpu_custom_call.1} parent=43 // pred_fallthru
          _
        // Predicated region
        $region49: #{tpu_custom_call.1} parent=43 // pred_check
          %p472 = pneg %p99
        $region50: #{tpu_custom_call.1} parent=43 // pred_check_branch
          %474 = sbr.rel (%p472) target = $region52
        $region51: #{tpu_custom_call.1} parent=43 // pred_region
          %s475 = sand.u32 %s29, 1
          %s476 = scalar_lea.sflag [#allocation7], %s475
          %s477 = sand.u32 %s89, 1
          %s478 = smul.addr %s477, 8
          %s479 = scalar_lea.vmem [#allocation6], %s478
          %s480 = smul.u32 %s37, 4
          %s481 = ssub.s32 %s480, 1
          %p482 = scmp.gt.s32.totalorder %s481, 0
          %s483 = scalar_select %p482, %s481, 0
          %485 = vsyncadd %s476, 0
          %s486 = smul.addr %s36, 8
          %s487 = sadd.s32 %s483, %s486
          %s488 = smul.addr %s487, 8
          %s489 = scalar_lea.hbm %s1, %s488
          %s491 = sshll.u32 %s489, 4
          %s492 = int_to_ptr.hbm [resolvable:$true] %s491
          %s493 = sshll.u32 %s479, 4
          %s494 = int_to_ptr.vmem [resolvable:$true] %s493
          %496 = dma.hbm_to_vmem [thread:$0]  %s492, 128, %s494, %s476
        $region52: #{tpu_custom_call.1} parent=43 // pred_fallthru
          _
        // Predicated region
        $region53: #{tpu_custom_call.1} parent=43 // pred_check
          %p497 = pneg %p135
        $region54: #{tpu_custom_call.1} parent=43 // pred_check_branch
          %499 = sbr.rel (%p497) target = $region56
        $region55: #{tpu_custom_call.1} parent=43 // pred_region
          %s500 = sand.u32 %s29, 1
          %s501 = scalar_lea.sflag [#allocation7], %s500
          %s502 = sand.u32 %s125, 1
          %s503 = smul.addr %s502, 8
          %s504 = scalar_lea.vmem [#allocation8], %s503
          %s505 = sadd.s32 %s37, 1
          %s506 = smul.u32 %s505, 4
          %p507 = scmp.lt.s32.totalorder %s506, 7
          %s508 = scalar_select %p507, %s506, 7
          %510 = vsyncadd %s501, 0
          %s511 = smul.addr %s36, 8
          %s512 = sadd.s32 %s508, %s511
          %s513 = smul.addr %s512, 8
          %s514 = scalar_lea.hbm %s2, %s513
          %s516 = sshll.u32 %s514, 4
          %s517 = int_to_ptr.hbm [resolvable:$true] %s516
          %s518 = sshll.u32 %s504, 4
          %s519 = int_to_ptr.vmem [resolvable:$true] %s518
          %521 = dma.hbm_to_vmem [thread:$0]  %s517, 128, %s519, %s501
        $region56: #{tpu_custom_call.1} parent=43 // pred_fallthru
          _
        // Predicated region
        $region57: #{tpu_custom_call.1} parent=43 // pred_check
          %p522 = pneg %p203
        $region58: #{tpu_custom_call.1} parent=43 // pred_check_branch
          %524 = sbr.rel (%p522) target = $region60
        $region59: #{tpu_custom_call.1} parent=43 // pred_region
          %p525 = scmp.lt.s32.totalorder %s36, 1
          %s526 = scalar_select %p525, %s36, 1
          %s527 = scalar_lea.vmem %s5, %s526
        $region60: #{tpu_custom_call.1} parent=43 // pred_fallthru
          _
        // Predicated region
        $region61: #{tpu_custom_call.1} parent=43 // pred_check
          %p528 = pneg %p229
        $region62: #{tpu_custom_call.1} parent=43 // pred_check_branch
          %530 = sbr.rel (%p528) target = $region64
        $region63: #{tpu_custom_call.1} parent=43 // pred_region
          %p531 = scmp.lt.s32.totalorder %s36, 1
          %s532 = scalar_select %p531, %s36, 1
          %s533 = scalar_lea.vmem %s6, %s532
        $region64: #{tpu_custom_call.1} parent=43 // pred_fallthru
          _
      $region44: #{tpu_custom_call.1} parent=5 // pred_fallthru
        _
      %p534 = scmp.le.s32.totalorder 1, %s29
      %p535 = scmp.lt.s32.totalorder %s29, 5
      %p536 = pnand %p534, %p535
      %p537 = pneg %p536
      // Predicated region
      $region65: #{tpu_custom_call.1} parent=5 // pred_check
        _
      $region66: #{tpu_custom_call.1} parent=5 // pred_check_branch
        %539 = sbr.rel (%p536) target = $region68
      $region67: #{tpu_custom_call.1} parent=5 // pred_region
        %s540 = ssub.s32 %s29, 1
        %s541 = sand.u32 %s56, 1
        %s542 = scalar_lea.sflag [#allocation4], %s541
        %s543 = sand.u32 %s56, 1
        %s544 = smul.addr %s543, 32
        %s545 = scalar_lea.vmem [#allocation3], %s544
        // Predicated region
        $region69: #{tpu_custom_call.1} parent=67 // pred_check
          %p546 = pneg %p69
        $region70: #{tpu_custom_call.1} parent=67 // pred_check_branch
          %548 = sbr.rel (%p546) target = $region72
        $region71: #{tpu_custom_call.1} parent=67 // pred_region
          %550 = dma.done %s542, 512
        $region72: #{tpu_custom_call.1} parent=67 // pred_fallthru
          _
        %s551 = sand.u32 %s34, 1
        %s552 = scalar_lea.sflag [#allocation7], %s551
        %s553 = sand.u32 %s92, 1
        %s554 = smul.addr %s553, 8
        %s555 = scalar_lea.vmem [#allocation6], %s554
        // Predicated region
        $region73: #{tpu_custom_call.1} parent=67 // pred_check
          %p556 = pneg %p105
        $region74: #{tpu_custom_call.1} parent=67 // pred_check_branch
          %558 = sbr.rel (%p556) target = $region76
        $region75: #{tpu_custom_call.1} parent=67 // pred_region
          %560 = dma.done %s552, 128
        $region76: #{tpu_custom_call.1} parent=67 // pred_fallthru
          _
        %s561 = sand.u32 %s34, 1
        %s562 = scalar_lea.sflag [#allocation7], %s561
        %s563 = sand.u32 %s128, 1
        %s564 = smul.addr %s563, 8
        %s565 = scalar_lea.vmem [#allocation8], %s564
        // Predicated region
        $region77: #{tpu_custom_call.1} parent=67 // pred_check
          %p566 = pneg %p141
        $region78: #{tpu_custom_call.1} parent=67 // pred_check_branch
          %568 = sbr.rel (%p566) target = $region80
        $region79: #{tpu_custom_call.1} parent=67 // pred_region
          %570 = dma.done %s562, 128
        $region80: #{tpu_custom_call.1} parent=67 // pred_fallthru
          _
        // Predicated region
        $region81: #{tpu_custom_call.1} parent=67 // pred_check
          %p571 = pneg %p162
        $region82: #{tpu_custom_call.1} parent=67 // pred_check_branch
          %573 = sbr.rel (%p571) target = $region84
        $region83: #{tpu_custom_call.1} parent=67 // pred_region
          %575 = dma.done [#allocation10], 128
        $region84: #{tpu_custom_call.1} parent=67 // pred_fallthru
          _
        // Predicated region
        $region85: #{tpu_custom_call.1} parent=67 // pred_check
          %p576 = pneg %p183
        $region86: #{tpu_custom_call.1} parent=67 // pred_check_branch
          %578 = sbr.rel (%p576) target = $region88
        $region87: #{tpu_custom_call.1} parent=67 // pred_region
          %580 = dma.done [#allocation10], 16
        $region88: #{tpu_custom_call.1} parent=67 // pred_fallthru
          _
        // Predicated region
        $region89: #{tpu_custom_call.1} parent=67 // pred_check
          %p581 = pneg %p256
        $region90: #{tpu_custom_call.1} parent=67 // pred_check_branch
          %583 = sbr.rel (%p581) target = $region92
        $region91: #{tpu_custom_call.1} parent=67 // pred_region
          %585 = dma.done [#allocation13], 2048
        $region92: #{tpu_custom_call.1} parent=67 // pred_fallthru
          _
        // Predicated region
        $region93: #{tpu_custom_call.1} parent=67 // pred_check
          %p586 = pneg %p298
        $region94: #{tpu_custom_call.1} parent=67 // pred_check_branch
          %588 = sbr.rel (%p586) target = $region96
        $region95: #{tpu_custom_call.1} parent=67 // pred_region
          %590 = dma.done [#allocation13], 2048
        $region96: #{tpu_custom_call.1} parent=67 // pred_fallthru
          _
        %s591 = sand.u32 %s56, 1
        %s592 = scalar_lea.sflag [#allocation4], %s591
        %s593 = sand.u32 %s56, 1
        %s594 = smul.addr %s593, 32
        %s595 = scalar_lea.vmem [#allocation3], %s594
        %p596 = pneg %p69
        %p597 = pneg %p66
        %s598 = sand.u32 %s34, 1
        %s599 = scalar_lea.sflag [#allocation7], %s598
        %s600 = sand.u32 %s92, 1
        %s601 = smul.addr %s600, 8
        %s602 = scalar_lea.vmem [#allocation6], %s601
        %p603 = pneg %p105
        %p604 = pneg %p102
        %s605 = sand.u32 %s34, 1
        %s606 = scalar_lea.sflag [#allocation7], %s605
        %s607 = sand.u32 %s128, 1
        %s608 = smul.addr %s607, 8
        %s609 = scalar_lea.vmem [#allocation8], %s608
        %p610 = pneg %p141
        %p611 = pneg %p138
        %p612 = pneg %p162
        %p613 = pneg %p159
        %p614 = pneg %p183
        %p615 = pneg %p180
        %p616 = scmp.lt.s32.totalorder %s38, 1
        %s617 = scalar_select %p616, %s38, 1
        %s618 = scalar_lea.vmem %s5, %s617
        %p619 = pneg %p209
        %p620 = pneg %p206
        %p621 = scmp.lt.s32.totalorder %s38, 1
        %s622 = scalar_select %p621, %s38, 1
        %s623 = scalar_lea.vmem %s6, %s622
        %p624 = pneg %p235
        %p625 = pneg %p232
        %p626 = pneg %p256
        %p627 = pneg %p253
        %p628 = pneg %p277
        %p629 = pneg %p274
        %p630 = pneg %p298
        %p631 = pneg %p295
        %p632 = pneg %p319
        %p633 = pneg %p316
        %p634 = pneg %p340
        %p635 = pneg %p337
        %p636 = pneg %p368
        %p637 = pneg %p365
        %s638 = sand.u32 %s355, 1
        %s639 = scalar_lea.sflag [#allocation5], %s638
        %s640 = sand.u32 %s355, 1
        %s641 = smul.addr %s640, 32
        %s642 = scalar_lea.vmem [#allocation15], %s641
        %s643 = smul.u32 4, %s39
        %s644 = smul.u32 %s39, 4
        %s645 = ssub.s32 %s644, 1
        %p646 = scmp.gt.s32.totalorder %s645, 0
        %s647 = scalar_select %p646, %s645, 0
        %s648 = sadd.s32 %s39, 1
        %s649 = smul.u32 %s648, 4
        %p650 = scmp.lt.s32.totalorder %s649, 7
        %s651 = scalar_select %p650, %s649, 7
        %p652 = scmp.lt.s32.totalorder %s38, 1
        %s653 = scalar_select %p652, %s38, 1
        %s654 = scalar_lea.vmem %s5, %s653
        %p655 = scmp.lt.s32.totalorder %s38, 1
        %s656 = scalar_select %p655, %s38, 1
        %s657 = scalar_lea.vmem %s6, %s656
        %s658 = smul.u32 4, %s39
        %v659 = vld [vmem:[%s545] sm:$0xff]
        %v660 = vld [vmem:[%s545 + $0x8] sm:$0xff]
        %v661 = vld [vmem:[%s545 + $0x10] sm:$0xff]
        %v662 = vld [vmem:[%s545 + $0x18] sm:$0xff]
        %663 = vst [vmem:[#allocation2 + $0x8] sm:$0xff] %v659
        %664 = vst [vmem:[#allocation2 + $0x10] sm:$0xff] %v660
        %665 = vst [vmem:[#allocation2 + $0x18] sm:$0xff] %v661
        %666 = vst [vmem:[#allocation2 + $0x20] sm:$0xff] %v662
        %v667 = vld [vmem:[%s555] sm:$0xff]
        %668 = vst [vmem:[#allocation2] sm:$0xff] %v667
        %v669 = vld [vmem:[%s565] sm:$0xff]
        %670 = vst [vmem:[#allocation2 + $0x28] sm:$0xff] %v669
        %p671 = scmp.eq.s32.totalorder %s39, 0
        // Predicated region
        $region97: #{tpu_custom_call.1} parent=67 // pred_check
          %p672 = pneg %p671
        $region98: #{tpu_custom_call.1} parent=67 // pred_check_branch
          %674 = sbr.rel (%p672) target = $region100
        $region99: #{tpu_custom_call.1} parent=67 // pred_region
          %675 = vst [vmem:[#allocation2] sm:$0xff] 0.0
        $region100: #{tpu_custom_call.1} parent=67 // pred_fallthru
          _
        %p676 = scmp.eq.s32.totalorder %s39, 1
        // Predicated region
        $region101: #{tpu_custom_call.1} parent=67 // pred_check
          %p677 = pneg %p676
        $region102: #{tpu_custom_call.1} parent=67 // pred_check_branch
          %679 = sbr.rel (%p677) target = $region104
        $region103: #{tpu_custom_call.1} parent=67 // pred_region
          %680 = vst [vmem:[#allocation2 + $0x28] sm:$0xff] 0.0
        $region104: #{tpu_custom_call.1} parent=67 // pred_fallthru
          _
        %v681 = vld [vmem:[#allocation9] sm:$0x7f]
        %v682 = vld [vmem:[#allocation2 + $0x5] sm:$0xff]
        %v683 = vld [vmem:[#allocation2 + $0xd] sm:$0xff]
        %v684 = vld [vmem:[#allocation2 + $0x15] sm:$0xff]
        %v685 = vld [vmem:[#allocation2 + $0x1d] sm:$0xff]
        %v686 = vperm.slane %v681, 0
        %v687 = vmul.f32 %v682, %v686
        %v688 = vmul.f32 %v683, %v686
        %v689 = vmul.f32 %v684, %v686
        %v690 = vmul.f32 %v685, %v686
        %v691 = vadd.f32 %v687, 0.0
        %v692 = vadd.f32 %v688, 0.0
        %v693 = vadd.f32 %v689, 0.0
        %v694 = vadd.f32 %v690, 0.0
        %v695 = vld [vmem:[#allocation2 + $0x6] sm:$0xff]
        %v696 = vld [vmem:[#allocation2 + $0xe] sm:$0xff]
        %v697 = vld [vmem:[#allocation2 + $0x16] sm:$0xff]
        %v698 = vld [vmem:[#allocation2 + $0x1e] sm:$0xff]
        %v699 = vperm.slane %v681, 1
        %v700 = vmul.f32 %v695, %v699
        %v701 = vmul.f32 %v696, %v699
        %v702 = vmul.f32 %v697, %v699
        %v703 = vmul.f32 %v698, %v699
        %v704 = vadd.f32 %v691, %v700
        %v705 = vadd.f32 %v692, %v701
        %v706 = vadd.f32 %v693, %v702
        %v707 = vadd.f32 %v694, %v703
        %v708 = vld [vmem:[#allocation2 + $0x7] sm:$0xff]
        %v709 = vld [vmem:[#allocation2 + $0xf] sm:$0xff]
        %v710 = vld [vmem:[#allocation2 + $0x17] sm:$0xff]
        %v711 = vld [vmem:[#allocation2 + $0x1f] sm:$0xff]
        %v712 = vperm.slane %v681, 2
        %v713 = vmul.f32 %v708, %v712
        %v714 = vmul.f32 %v709, %v712
        %v715 = vmul.f32 %v710, %v712
        %v716 = vmul.f32 %v711, %v712
        %v717 = vadd.f32 %v704, %v713
        %v718 = vadd.f32 %v705, %v714
        %v719 = vadd.f32 %v706, %v715
        %v720 = vadd.f32 %v707, %v716
        %v721 = vld [vmem:[#allocation2 + $0x8] sm:$0xff]
        %v722 = vld [vmem:[#allocation2 + $0x10] sm:$0xff]
        %v723 = vld [vmem:[#allocation2 + $0x18] sm:$0xff]
        %v724 = vld [vmem:[#allocation2 + $0x20] sm:$0xff]
        %v725 = vperm.slane %v681, 3
        %v726 = vmul.f32 %v721, %v725
        %v727 = vmul.f32 %v722, %v725
        %v728 = vmul.f32 %v723, %v725
        %v729 = vmul.f32 %v724, %v725
        %v730 = vadd.f32 %v717, %v726
        %v731 = vadd.f32 %v718, %v727
        %v732 = vadd.f32 %v719, %v728
        %v733 = vadd.f32 %v720, %v729
        %v734 = vld [vmem:[#allocation2 + $0x9] sm:$0xff]
        %v735 = vld [vmem:[#allocation2 + $0x11] sm:$0xff]
        %v736 = vld [vmem:[#allocation2 + $0x19] sm:$0xff]
        %v737 = vld [vmem:[#allocation2 + $0x21] sm:$0xff]
        %v738 = vperm.slane %v681, 4
        %v739 = vmul.f32 %v734, %v738
        %v740 = vmul.f32 %v735, %v738
        %v741 = vmul.f32 %v736, %v738
        %v742 = vmul.f32 %v737, %v738
        %v743 = vadd.f32 %v730, %v739
        %v744 = vadd.f32 %v731, %v740
        %v745 = vadd.f32 %v732, %v741
        %v746 = vadd.f32 %v733, %v742
        %v747 = vld [vmem:[#allocation2 + $0xa] sm:$0xff]
        %v748 = vld [vmem:[#allocation2 + $0x12] sm:$0xff]
        %v749 = vld [vmem:[#allocation2 + $0x1a] sm:$0xff]
        %v750 = vld [vmem:[#allocation2 + $0x22] sm:$0xff]
        %v751 = vperm.slane %v681, 5
        %v752 = vmul.f32 %v747, %v751
        %v753 = vmul.f32 %v748, %v751
        %v754 = vmul.f32 %v749, %v751
        %v755 = vmul.f32 %v750, %v751
        %v756 = vadd.f32 %v743, %v752
        %v757 = vadd.f32 %v744, %v753
        %v758 = vadd.f32 %v745, %v754
        %v759 = vadd.f32 %v746, %v755
        %v760 = vld [vmem:[#allocation2 + $0xb] sm:$0xff]
        %v761 = vld [vmem:[#allocation2 + $0x13] sm:$0xff]
        %v762 = vld [vmem:[#allocation2 + $0x1b] sm:$0xff]
        %v763 = vld [vmem:[#allocation2 + $0x23] sm:$0xff]
        %v764 = vperm.slane %v681, 6
        %v765 = vmul.f32 %v760, %v764
        %v766 = vmul.f32 %v761, %v764
        %v767 = vmul.f32 %v762, %v764
        %v768 = vmul.f32 %v763, %v764
        %v769 = vadd.f32 %v756, %v765
        %v770 = vadd.f32 %v757, %v766
        %v771 = vadd.f32 %v758, %v767
        %v772 = vadd.f32 %v759, %v768
        %v773 = vld [vmem:[#allocation11] sm:$0x1]
        %v775 = vperm.slane %v773, 0
        %v777 = vadd.f32 %v769, %v775
        %v778 = vadd.f32 %v770, %v775
        %v779 = vadd.f32 %v771, %v775
        %v780 = vadd.f32 %v772, %v775
        %781 = vadd.xlane.f32.xlu0 %v777
        %v782 = vpop.xlane.xlu0 %781
        %783 = vadd.xlane.f32.xlu0 %v778
        %v784 = vpop.xlane.xlu0 %783
        %785 = vadd.xlane.f32.xlu0 %v779
        %v786 = vpop.xlane.xlu0 %785
        %787 = vadd.xlane.f32.xlu0 %v780
        %v788 = vpop.xlane.xlu0 %787
        %v789 = vrcp.pop 128.0
        %v790 = vmul.f32 128.0, %v789
        %v791 = vsub.f32 1.0, %v790
        %v792 = vmul.f32 %v789, %v791
        %v793 = vadd.f32 %v789, %v792
        %vm794 = vweird.f32 %v789
        %v795 = vsel %vm794, %v789, %v793
        %v796 = vmul.f32 %v782, %v795
        %v797 = vmul.f32 %v784, %v795
        %v798 = vmul.f32 %v786, %v795
        %v799 = vmul.f32 %v788, %v795
        %v800 = vsub.f32 %v777, %v796
        %v801 = vsub.f32 %v778, %v797
        %v802 = vsub.f32 %v779, %v798
        %v803 = vsub.f32 %v780, %v799
        %v804 = vmul.f32 %v800, %v800
        %v805 = vmul.f32 %v801, %v801
        %v806 = vmul.f32 %v802, %v802
        %v807 = vmul.f32 %v803, %v803
        %808 = vadd.xlane.f32.xlu0 %v804
        %v809 = vpop.xlane.xlu0 %808
        %810 = vadd.xlane.f32.xlu0 %v805
        %v811 = vpop.xlane.xlu0 %810
        %812 = vadd.xlane.f32.xlu0 %v806
        %v813 = vpop.xlane.xlu0 %812
        %814 = vadd.xlane.f32.xlu0 %v807
        %v815 = vpop.xlane.xlu0 %814
        %v816 = vmul.f32 %v809, %v795
        %v817 = vmul.f32 %v811, %v795
        %v818 = vmul.f32 %v813, %v795
        %v819 = vmul.f32 %v815, %v795
        %v820 = vadd.f32 %v816, 1e-06
        %v821 = vadd.f32 %v817, 1e-06
        %v822 = vadd.f32 %v818, 1e-06
        %v823 = vadd.f32 %v819, 1e-06
        %v824 = vrsqrt.pop %v820
        %v825 = vmul.f32 %v824, %v820
        %v826 = vmul.f32 %v825, %v824
        %v827 = vmul.f32 0.5, %v826
        %v828 = vsub.f32 1.5, %v827
        %v829 = vmul.f32 %v824, %v828
        %vm830 = vweird.f32 %v820
        %vm831 = vweird.f32 %v824
        %vm832 = vmor %vm830, %vm831
        %v833 = vsel %vm832, %v824, %v829
        %v834 = vrsqrt.pop %v821
        %v835 = vmul.f32 %v834, %v821
        %v836 = vmul.f32 %v835, %v834
        %v837 = vmul.f32 0.5, %v836
        %v838 = vsub.f32 1.5, %v837
        %v839 = vmul.f32 %v834, %v838
        %vm840 = vweird.f32 %v821
        %vm841 = vweird.f32 %v834
        %vm842 = vmor %vm840, %vm841
        %v843 = vsel %vm842, %v834, %v839
        %v844 = vrsqrt.pop %v822
        %v845 = vmul.f32 %v844, %v822
        %v846 = vmul.f32 %v845, %v844
        %v847 = vmul.f32 0.5, %v846
        %v848 = vsub.f32 1.5, %v847
        %v849 = vmul.f32 %v844, %v848
        %vm850 = vweird.f32 %v822
        %vm851 = vweird.f32 %v844
        %vm852 = vmor %vm850, %vm851
        %v853 = vsel %vm852, %v844, %v849
        %v854 = vrsqrt.pop %v823
        %v855 = vmul.f32 %v854, %v823
        %v856 = vmul.f32 %v855, %v854
        %v857 = vmul.f32 0.5, %v856
        %v858 = vsub.f32 1.5, %v857
        %v859 = vmul.f32 %v854, %v858
        %vm860 = vweird.f32 %v823
        %vm861 = vweird.f32 %v854
        %vm862 = vmor %vm860, %vm861
        %v863 = vsel %vm862, %v854, %v859
        %v864 = vmul.f32 %v800, %v833
        %v865 = vmul.f32 %v801, %v843
        %v866 = vmul.f32 %v802, %v853
        %v867 = vmul.f32 %v803, %v863
        %v868 = vld [vmem:[%s654] sm:$0x1]
        %v870 = vperm.slane %v868, 0
        %v872 = vmul.f32 %v864, %v870
        %v873 = vmul.f32 %v865, %v870
        %v874 = vmul.f32 %v866, %v870
        %v875 = vmul.f32 %v867, %v870
        %v876 = vld [vmem:[%s657] sm:$0x1]
        %v878 = vperm.slane %v876, 0
        %v880 = vadd.f32 %v872, %v878
        %v881 = vadd.f32 %v873, %v878
        %v882 = vadd.f32 %v874, %v878
        %v883 = vadd.f32 %v875, %v878
        %v884 = vpack.c.bf16 %v881, %v880
        %v885 = vpack.c.bf16 %v883, %v882
        %v886 = vld [vmem:[#allocation12] sm:$0xff]
        %v887 = vld [vmem:[#allocation12 + $0x8] sm:$0xff]
        %v888 = vld [vmem:[#allocation12 + $0x10] sm:$0xff]
        %v889 = vld [vmem:[#allocation12 + $0x18] sm:$0xff]
        %v890 = vld [vmem:[#allocation12 + $0x20] sm:$0xff]
        %v891 = vld [vmem:[#allocation12 + $0x28] sm:$0xff]
        %v892 = vld [vmem:[#allocation12 + $0x30] sm:$0xff]
        %v893 = vld [vmem:[#allocation12 + $0x38] sm:$0xff]
        %v894 = vld [vmem:[#allocation12 + $0x40] sm:$0xff]
        %v895 = vld [vmem:[#allocation12 + $0x48] sm:$0xff]
        %v896 = vld [vmem:[#allocation12 + $0x50] sm:$0xff]
        %v897 = vld [vmem:[#allocation12 + $0x58] sm:$0xff]
        %v898 = vld [vmem:[#allocation12 + $0x60] sm:$0xff]
        %v899 = vld [vmem:[#allocation12 + $0x68] sm:$0xff]
        %v900 = vld [vmem:[#allocation12 + $0x70] sm:$0xff]
        %v901 = vld [vmem:[#allocation12 + $0x78] sm:$0xff]
        %v902 = vld [vmem:[%s8] sm:$0x3]
        %v904 = vperm.slane %v902, 0
        %v905 = vperm.slane %v902, 1
        %v924 = vunpack.c.l.b16 %v886
        %v925 = vunpack.c.h.b16 %v886
        %v926 = vunpack.c.l.b16 %v887
        %v927 = vunpack.c.h.b16 %v887
        %v928 = vunpack.c.l.b16 %v888
        %v929 = vunpack.c.h.b16 %v888
        %v930 = vunpack.c.l.b16 %v889
        %v931 = vunpack.c.h.b16 %v889
        %v932 = vunpack.c.l.b16 %v890
        %v933 = vunpack.c.h.b16 %v890
        %v934 = vunpack.c.l.b16 %v891
        %v935 = vunpack.c.h.b16 %v891
        %v936 = vunpack.c.l.b16 %v892
        %v937 = vunpack.c.h.b16 %v892
        %v938 = vunpack.c.l.b16 %v893
        %v939 = vunpack.c.h.b16 %v893
        %v940 = vunpack.c.l.b16 %v894
        %v941 = vunpack.c.h.b16 %v894
        %v942 = vunpack.c.l.b16 %v895
        %v943 = vunpack.c.h.b16 %v895
        %v944 = vunpack.c.l.b16 %v896
        %v945 = vunpack.c.h.b16 %v896
        %v946 = vunpack.c.l.b16 %v897
        %v947 = vunpack.c.h.b16 %v897
        %v948 = vunpack.c.l.b16 %v898
        %v949 = vunpack.c.h.b16 %v898
        %v950 = vunpack.c.l.b16 %v899
        %v951 = vunpack.c.h.b16 %v899
        %v952 = vunpack.c.l.b16 %v900
        %v953 = vunpack.c.h.b16 %v900
        %v954 = vunpack.c.l.b16 %v901
        %v955 = vunpack.c.h.b16 %v901
        %v956 = vpack.c.b16 %v926, %v924
        %v957 = vpack.c.b16 %v927, %v925
        %v958 = vpack.c.b16 %v930, %v928
        %v959 = vpack.c.b16 %v931, %v929
        %v960 = vpack.c.b16 %v934, %v932
        %v961 = vpack.c.b16 %v935, %v933
        %v962 = vpack.c.b16 %v938, %v936
        %v963 = vpack.c.b16 %v939, %v937
        %v964 = vpack.c.b16 %v942, %v940
        %v965 = vpack.c.b16 %v943, %v941
        %v966 = vpack.c.b16 %v946, %v944
        %v967 = vpack.c.b16 %v947, %v945
        %v968 = vpack.c.b16 %v950, %v948
        %v969 = vpack.c.b16 %v951, %v949
        %v970 = vpack.c.b16 %v954, %v952
        %v971 = vpack.c.b16 %v955, %v953
        %988 = vmatpush.bf16.msra.mxu0 %v970
        %989 = vmatpush.bf16.msra.mxu0 %v968
        %990 = vmatpush.bf16.msra.mxu0 %v966
        %991 = vmatpush.bf16.msra.mxu0 %v964
        %992 = vmatpush.bf16.msra.mxu0 %v962
        %993 = vmatpush.bf16.msra.mxu0 %v960
        %994 = vmatpush.bf16.msra.mxu0 %v958
        %995 = vmatpush.bf16.msra.mxu0 %v956
        %996 = vmatmul.bf16.gmra.mxu0 %v884
        %v997 = vpop.f32.mrf.mxu0
        %v998 = vadd.f32 %v904, %v997
        %v999 = vpop.f32.mrf.mxu0
        %v1000 = vadd.f32 %v904, %v999
        %1001 = vmatmul.bf16.gmra.mxu0 %v885
        %v1002 = vpop.f32.mrf.mxu0
        %v1003 = vadd.f32 %v904, %v1002
        %v1004 = vpop.f32.mrf.mxu0
        %v1005 = vadd.f32 %v904, %v1004
        %1006 = vdwg.mxu0
        %1007 = vmatpush.bf16.msra.mxu0 %v971
        %1008 = vmatpush.bf16.msra.mxu0 %v969
        %1009 = vmatpush.bf16.msra.mxu0 %v967
        %1010 = vmatpush.bf16.msra.mxu0 %v965
        %1011 = vmatpush.bf16.msra.mxu0 %v963
        %1012 = vmatpush.bf16.msra.mxu0 %v961
        %1013 = vmatpush.bf16.msra.mxu0 %v959
        %1014 = vmatpush.bf16.msra.mxu0 %v957
        %1015 = vmatmul.bf16.gmra.mxu0 %v884
        %v1016 = vpop.f32.mrf.mxu0
        %v1017 = vadd.f32 %v905, %v1016
        %v1018 = vpop.f32.mrf.mxu0
        %v1019 = vadd.f32 %v905, %v1018
        %1020 = vmatmul.bf16.gmra.mxu0 %v885
        %v1021 = vpop.f32.mrf.mxu0
        %v1022 = vadd.f32 %v905, %v1021
        %v1023 = vpop.f32.mrf.mxu0
        %v1024 = vadd.f32 %v905, %v1023
        %1025 = vdwg.mxu0
        %v1026 = vmul.f32 %v998, 0.5
        %v1027 = vmul.f32 %v1017, 0.5
        %v1028 = vmul.f32 %v1000, 0.5
        %v1029 = vmul.f32 %v1019, 0.5
        %v1030 = vmul.f32 %v1003, 0.5
        %v1031 = vmul.f32 %v1022, 0.5
        %v1032 = vmul.f32 %v1005, 0.5
        %v1033 = vmul.f32 %v1024, 0.5
        %v1034 = vmul.f32 %v998, 0.70710677
        %v1035 = vmul.f32 %v1017, 0.70710677
        %v1036 = vmul.f32 %v1000, 0.70710677
        %v1037 = vmul.f32 %v1019, 0.70710677
        %v1038 = vmul.f32 %v1003, 0.70710677
        %v1039 = vmul.f32 %v1022, 0.70710677
        %v1040 = vmul.f32 %v1005, 0.70710677
        %v1041 = vmul.f32 %v1024, 0.70710677
        %v1042 = vand.u32 2147483647, %v1034
        %v1043 = vand.u32 2147483647, %v1035
        %v1044 = vand.u32 2147483647, %v1036
        %v1045 = vand.u32 2147483647, %v1037
        %v1046 = vand.u32 2147483647, %v1038
        %v1047 = vand.u32 2147483647, %v1039
        %v1048 = vand.u32 2147483647, %v1040
        %v1049 = vand.u32 2147483647, %v1041
        %v1050 = vmul.f32 %v1042, 0.3275911
        %v1051 = vmul.f32 %v1043, 0.3275911
        %v1052 = vmul.f32 %v1044, 0.3275911
        %v1053 = vmul.f32 %v1045, 0.3275911
        %v1054 = vmul.f32 %v1046, 0.3275911
        %v1055 = vmul.f32 %v1047, 0.3275911
        %v1056 = vmul.f32 %v1048, 0.3275911
        %v1057 = vmul.f32 %v1049, 0.3275911
        %v1058 = vadd.f32 %v1050, 1.0
        %v1059 = vadd.f32 %v1051, 1.0
        %v1060 = vadd.f32 %v1052, 1.0
        %v1061 = vadd.f32 %v1053, 1.0
        %v1062 = vadd.f32 %v1054, 1.0
        %v1063 = vadd.f32 %v1055, 1.0
        %v1064 = vadd.f32 %v1056, 1.0
        %v1065 = vadd.f32 %v1057, 1.0
        %v1066 = vrcp.pop %v1058
        %v1067 = vmul.f32 %v1058, %v1066
        %v1068 = vsub.f32 1.0, %v1067
        %v1069 = vmul.f32 %v1066, %v1068
        %v1070 = vadd.f32 %v1066, %v1069
        %vm1071 = vweird.f32 %v1058
        %vm1072 = vweird.f32 %v1066
        %vm1073 = vmor %vm1071, %vm1072
        %v1074 = vsel %vm1073, %v1066, %v1070
        %v1075 = vand.u32 2147483647, %v1058
        %vm1076 = vcmp.eq.f32.partialorder %v1075, 8.507059e+37
        %v1077 = vand.u32 %v1058, 2147483648
        %v1078 = vor.u32 1.1754944e-38, %v1077
        %v1079 = vsel %vm1076, %v1078, %v1074
        %v1080 = vmul.f32 1.0, %v1079
        %v1081 = vrcp.pop %v1059
        %v1082 = vmul.f32 %v1059, %v1081
        %v1083 = vsub.f32 1.0, %v1082
        %v1084 = vmul.f32 %v1081, %v1083
        %v1085 = vadd.f32 %v1081, %v1084
        %vm1086 = vweird.f32 %v1059
        %vm1087 = vweird.f32 %v1081
        %vm1088 = vmor %vm1086, %vm1087
        %v1089 = vsel %vm1088, %v1081, %v1085
        %v1090 = vand.u32 2147483647, %v1059
        %vm1091 = vcmp.eq.f32.partialorder %v1090, 8.507059e+37
        %v1092 = vand.u32 %v1059, 2147483648
        %v1093 = vor.u32 1.1754944e-38, %v1092
        %v1094 = vsel %vm1091, %v1093, %v1089
        %v1095 = vmul.f32 1.0, %v1094
        %v1096 = vrcp.pop %v1060
        %v1097 = vmul.f32 %v1060, %v1096
        %v1098 = vsub.f32 1.0, %v1097
        %v1099 = vmul.f32 %v1096, %v1098
        %v1100 = vadd.f32 %v1096, %v1099
        %vm1101 = vweird.f32 %v1060
        %vm1102 = vweird.f32 %v1096
        %vm1103 = vmor %vm1101, %vm1102
        %v1104 = vsel %vm1103, %v1096, %v1100
        %v1105 = vand.u32 2147483647, %v1060
        %vm1106 = vcmp.eq.f32.partialorder %v1105, 8.507059e+37
        %v1107 = vand.u32 %v1060, 2147483648
        %v1108 = vor.u32 1.1754944e-38, %v1107
        %v1109 = vsel %vm1106, %v1108, %v1104
        %v1110 = vmul.f32 1.0, %v1109
        %v1111 = vrcp.pop %v1061
        %v1112 = vmul.f32 %v1061, %v1111
        %v1113 = vsub.f32 1.0, %v1112
        %v1114 = vmul.f32 %v1111, %v1113
        %v1115 = vadd.f32 %v1111, %v1114
        %vm1116 = vweird.f32 %v1061
        %vm1117 = vweird.f32 %v1111
        %vm1118 = vmor %vm1116, %vm1117
        %v1119 = vsel %vm1118, %v1111, %v1115
        %v1120 = vand.u32 2147483647, %v1061
        %vm1121 = vcmp.eq.f32.partialorder %v1120, 8.507059e+37
        %v1122 = vand.u32 %v1061, 2147483648
        %v1123 = vor.u32 1.1754944e-38, %v1122
        %v1124 = vsel %vm1121, %v1123, %v1119
        %v1125 = vmul.f32 1.0, %v1124
        %v1126 = vrcp.pop %v1062
        %v1127 = vmul.f32 %v1062, %v1126
        %v1128 = vsub.f32 1.0, %v1127
        %v1129 = vmul.f32 %v1126, %v1128
        %v1130 = vadd.f32 %v1126, %v1129
        %vm1131 = vweird.f32 %v1062
        %vm1132 = vweird.f32 %v1126
        %vm1133 = vmor %vm1131, %vm1132
        %v1134 = vsel %vm1133, %v1126, %v1130
        %v1135 = vand.u32 2147483647, %v1062
        %vm1136 = vcmp.eq.f32.partialorder %v1135, 8.507059e+37
        %v1137 = vand.u32 %v1062, 2147483648
        %v1138 = vor.u32 1.1754944e-38, %v1137
        %v1139 = vsel %vm1136, %v1138, %v1134
        %v1140 = vmul.f32 1.0, %v1139
        %v1141 = vrcp.pop %v1063
        %v1142 = vmul.f32 %v1063, %v1141
        %v1143 = vsub.f32 1.0, %v1142
        %v1144 = vmul.f32 %v1141, %v1143
        %v1145 = vadd.f32 %v1141, %v1144
        %vm1146 = vweird.f32 %v1063
        %vm1147 = vweird.f32 %v1141
        %vm1148 = vmor %vm1146, %vm1147
        %v1149 = vsel %vm1148, %v1141, %v1145
        %v1150 = vand.u32 2147483647, %v1063
        %vm1151 = vcmp.eq.f32.partialorder %v1150, 8.507059e+37
        %v1152 = vand.u32 %v1063, 2147483648
        %v1153 = vor.u32 1.1754944e-38, %v1152
        %v1154 = vsel %vm1151, %v1153, %v1149
        %v1155 = vmul.f32 1.0, %v1154
        %v1156 = vrcp.pop %v1064
        %v1157 = vmul.f32 %v1064, %v1156
        %v1158 = vsub.f32 1.0, %v1157
        %v1159 = vmul.f32 %v1156, %v1158
        %v1160 = vadd.f32 %v1156, %v1159
        %vm1161 = vweird.f32 %v1064
        %vm1162 = vweird.f32 %v1156
        %vm1163 = vmor %vm1161, %vm1162
        %v1164 = vsel %vm1163, %v1156, %v1160
        %v1165 = vand.u32 2147483647, %v1064
        %vm1166 = vcmp.eq.f32.partialorder %v1165, 8.507059e+37
        %v1167 = vand.u32 %v1064, 2147483648
        %v1168 = vor.u32 1.1754944e-38, %v1167
        %v1169 = vsel %vm1166, %v1168, %v1164
        %v1170 = vmul.f32 1.0, %v1169
        %v1171 = vrcp.pop %v1065
        %v1172 = vmul.f32 %v1065, %v1171
        %v1173 = vsub.f32 1.0, %v1172
        %v1174 = vmul.f32 %v1171, %v1173
        %v1175 = vadd.f32 %v1171, %v1174
        %vm1176 = vweird.f32 %v1065
        %vm1177 = vweird.f32 %v1171
        %vm1178 = vmor %vm1176, %vm1177
        %v1179 = vsel %vm1178, %v1171, %v1175
        %v1180 = vand.u32 2147483647, %v1065
        %vm1181 = vcmp.eq.f32.partialorder %v1180, 8.507059e+37
        %v1182 = vand.u32 %v1065, 2147483648
        %v1183 = vor.u32 1.1754944e-38, %v1182
        %v1184 = vsel %vm1181, %v1183, %v1179
        %v1185 = vmul.f32 1.0, %v1184
        %v1186 = vmul.f32 %v1080, 1.0614054
        %v1187 = vmul.f32 %v1095, 1.0614054
        %v1188 = vmul.f32 %v1110, 1.0614054
        %v1189 = vmul.f32 %v1125, 1.0614054
        %v1190 = vmul.f32 %v1140, 1.0614054
        %v1191 = vmul.f32 %v1155, 1.0614054
        %v1192 = vmul.f32 %v1170, 1.0614054
        %v1193 = vmul.f32 %v1185, 1.0614054
        %v1194 = vadd.f32 %v1186, -1.4531521
        %v1195 = vadd.f32 %v1187, -1.4531521
        %v1196 = vadd.f32 %v1188, -1.4531521
        %v1197 = vadd.f32 %v1189, -1.4531521
        %v1198 = vadd.f32 %v1190, -1.4531521
        %v1199 = vadd.f32 %v1191, -1.4531521
        %v1200 = vadd.f32 %v1192, -1.4531521
        %v1201 = vadd.f32 %v1193, -1.4531521
        %v1202 = vmul.f32 %v1194, %v1080
        %v1203 = vmul.f32 %v1195, %v1095
        %v1204 = vmul.f32 %v1196, %v1110
        %v1205 = vmul.f32 %v1197, %v1125
        %v1206 = vmul.f32 %v1198, %v1140
        %v1207 = vmul.f32 %v1199, %v1155
        %v1208 = vmul.f32 %v1200, %v1170
        %v1209 = vmul.f32 %v1201, %v1185
        %v1210 = vadd.f32 %v1202, 1.4214138
        %v1211 = vadd.f32 %v1203, 1.4214138
        %v1212 = vadd.f32 %v1204, 1.4214138
        %v1213 = vadd.f32 %v1205, 1.4214138
        %v1214 = vadd.f32 %v1206, 1.4214138
        %v1215 = vadd.f32 %v1207, 1.4214138
        %v1216 = vadd.f32 %v1208, 1.4214138
        %v1217 = vadd.f32 %v1209, 1.4214138
        %v1218 = vmul.f32 %v1210, %v1080
        %v1219 = vmul.f32 %v1211, %v1095
        %v1220 = vmul.f32 %v1212, %v1110
        %v1221 = vmul.f32 %v1213, %v1125
        %v1222 = vmul.f32 %v1214, %v1140
        %v1223 = vmul.f32 %v1215, %v1155
        %v1224 = vmul.f32 %v1216, %v1170
        %v1225 = vmul.f32 %v1217, %v1185
        %v1226 = vadd.f32 %v1218, -0.28449672
        %v1227 = vadd.f32 %v1219, -0.28449672
        %v1228 = vadd.f32 %v1220, -0.28449672
        %v1229 = vadd.f32 %v1221, -0.28449672
        %v1230 = vadd.f32 %v1222, -0.28449672
        %v1231 = vadd.f32 %v1223, -0.28449672
        %v1232 = vadd.f32 %v1224, -0.28449672
        %v1233 = vadd.f32 %v1225, -0.28449672
        %v1234 = vmul.f32 %v1226, %v1080
        %v1235 = vmul.f32 %v1227, %v1095
        %v1236 = vmul.f32 %v1228, %v1110
        %v1237 = vmul.f32 %v1229, %v1125
        %v1238 = vmul.f32 %v1230, %v1140
        %v1239 = vmul.f32 %v1231, %v1155
        %v1240 = vmul.f32 %v1232, %v1170
        %v1241 = vmul.f32 %v1233, %v1185
        %v1242 = vadd.f32 %v1234, 0.2548296
        %v1243 = vadd.f32 %v1235, 0.2548296
        %v1244 = vadd.f32 %v1236, 0.2548296
        %v1245 = vadd.f32 %v1237, 0.2548296
        %v1246 = vadd.f32 %v1238, 0.2548296
        %v1247 = vadd.f32 %v1239, 0.2548296
        %v1248 = vadd.f32 %v1240, 0.2548296
        %v1249 = vadd.f32 %v1241, 0.2548296
        %v1250 = vmul.f32 %v1242, %v1080
        %v1251 = vmul.f32 %v1243, %v1095
        %v1252 = vmul.f32 %v1244, %v1110
        %v1253 = vmul.f32 %v1245, %v1125
        %v1254 = vmul.f32 %v1246, %v1140
        %v1255 = vmul.f32 %v1247, %v1155
        %v1256 = vmul.f32 %v1248, %v1170
        %v1257 = vmul.f32 %v1249, %v1185
        %v1258 = vsub.f32 0.0, %v1042
        %v1259 = vsub.f32 0.0, %v1043
        %v1260 = vsub.f32 0.0, %v1044
        %v1261 = vsub.f32 0.0, %v1045
        %v1262 = vsub.f32 0.0, %v1046
        %v1263 = vsub.f32 0.0, %v1047
        %v1264 = vsub.f32 0.0, %v1048
        %v1265 = vsub.f32 0.0, %v1049
        %v1266 = vmul.f32 %v1258, %v1042
        %v1267 = vmul.f32 %v1259, %v1043
        %v1268 = vmul.f32 %v1260, %v1044
        %v1269 = vmul.f32 %v1261, %v1045
        %v1270 = vmul.f32 %v1262, %v1046
        %v1271 = vmul.f32 %v1263, %v1047
        %v1272 = vmul.f32 %v1264, %v1048
        %v1273 = vmul.f32 %v1265, %v1049
        %v1274 = vmul.f32 %v1266, 1.442695
        %v1275 = vpow.pop %v1274
        %v1276 = vmul.f32 %v1267, 1.442695
        %v1277 = vpow.pop %v1276
        %v1278 = vmul.f32 %v1268, 1.442695
        %v1279 = vpow.pop %v1278
        %v1280 = vmul.f32 %v1269, 1.442695
        %v1281 = vpow.pop %v1280
        %v1282 = vmul.f32 %v1270, 1.442695
        %v1283 = vpow.pop %v1282
        %v1284 = vmul.f32 %v1271, 1.442695
        %v1285 = vpow.pop %v1284
        %v1286 = vmul.f32 %v1272, 1.442695
        %v1287 = vpow.pop %v1286
        %v1288 = vmul.f32 %v1273, 1.442695
        %v1289 = vpow.pop %v1288
        %v1290 = vmul.f32 %v1250, %v1275
        %v1291 = vmul.f32 %v1251, %v1277
        %v1292 = vmul.f32 %v1252, %v1279
        %v1293 = vmul.f32 %v1253, %v1281
        %v1294 = vmul.f32 %v1254, %v1283
        %v1295 = vmul.f32 %v1255, %v1285
        %v1296 = vmul.f32 %v1256, %v1287
        %v1297 = vmul.f32 %v1257, %v1289
        %v1298 = vsub.f32 1.0, %v1290
        %v1299 = vsub.f32 1.0, %v1291
        %v1300 = vsub.f32 1.0, %v1292
        %v1301 = vsub.f32 1.0, %v1293
        %v1302 = vsub.f32 1.0, %v1294
        %v1303 = vsub.f32 1.0, %v1295
        %v1304 = vsub.f32 1.0, %v1296
        %v1305 = vsub.f32 1.0, %v1297
        %vm1306 = vcmp.ge.f32.partialorder %v1034, 0.0
        %vm1307 = vcmp.ge.f32.partialorder %v1035, 0.0
        %vm1308 = vcmp.ge.f32.partialorder %v1036, 0.0
        %vm1309 = vcmp.ge.f32.partialorder %v1037, 0.0
        %vm1310 = vcmp.ge.f32.partialorder %v1038, 0.0
        %vm1311 = vcmp.ge.f32.partialorder %v1039, 0.0
        %vm1312 = vcmp.ge.f32.partialorder %v1040, 0.0
        %vm1313 = vcmp.ge.f32.partialorder %v1041, 0.0
        %v1314 = vsub.f32 0.0, %v1298
        %v1315 = vsub.f32 0.0, %v1299
        %v1316 = vsub.f32 0.0, %v1300
        %v1317 = vsub.f32 0.0, %v1301
        %v1318 = vsub.f32 0.0, %v1302
        %v1319 = vsub.f32 0.0, %v1303
        %v1320 = vsub.f32 0.0, %v1304
        %v1321 = vsub.f32 0.0, %v1305
        %v1322 = vsel %vm1306, %v1298, %v1314
        %v1323 = vsel %vm1307, %v1299, %v1315
        %v1324 = vsel %vm1308, %v1300, %v1316
        %v1325 = vsel %vm1309, %v1301, %v1317
        %v1326 = vsel %vm1310, %v1302, %v1318
        %v1327 = vsel %vm1311, %v1303, %v1319
        %v1328 = vsel %vm1312, %v1304, %v1320
        %v1329 = vsel %vm1313, %v1305, %v1321
        %v1330 = vadd.f32 %v1322, 1.0
        %v1331 = vadd.f32 %v1323, 1.0
        %v1332 = vadd.f32 %v1324, 1.0
        %v1333 = vadd.f32 %v1325, 1.0
        %v1334 = vadd.f32 %v1326, 1.0
        %v1335 = vadd.f32 %v1327, 1.0
        %v1336 = vadd.f32 %v1328, 1.0
        %v1337 = vadd.f32 %v1329, 1.0
        %v1338 = vmul.f32 %v1026, %v1330
        %v1339 = vmul.f32 %v1027, %v1331
        %v1340 = vmul.f32 %v1028, %v1332
        %v1341 = vmul.f32 %v1029, %v1333
        %v1342 = vmul.f32 %v1030, %v1334
        %v1343 = vmul.f32 %v1031, %v1335
        %v1344 = vmul.f32 %v1032, %v1336
        %v1345 = vmul.f32 %v1033, %v1337
        %v1346 = vpack.c.bf16 %v1340, %v1338
        %v1347 = vpack.c.bf16 %v1341, %v1339
        %v1348 = vpack.c.bf16 %v1344, %v1342
        %v1349 = vpack.c.bf16 %v1345, %v1343
        %v1350 = vld [vmem:[#allocation14] sm:$0xf]
        %v1351 = vld [vmem:[#allocation14 + $0x4] sm:$0xf]
        %v1352 = vld [vmem:[#allocation14 + $0x8] sm:$0xf]
        %v1353 = vld [vmem:[#allocation14 + $0xc] sm:$0xf]
        %v1354 = vld [vmem:[#allocation14 + $0x10] sm:$0xf]
        %v1355 = vld [vmem:[#allocation14 + $0x14] sm:$0xf]
        %v1356 = vld [vmem:[#allocation14 + $0x18] sm:$0xf]
        %v1357 = vld [vmem:[#allocation14 + $0x1c] sm:$0xf]
        %v1358 = vld [vmem:[#allocation14 + $0x20] sm:$0xf]
        %v1359 = vld [vmem:[#allocation14 + $0x24] sm:$0xf]
        %v1360 = vld [vmem:[#allocation14 + $0x28] sm:$0xf]
        %v1361 = vld [vmem:[#allocation14 + $0x2c] sm:$0xf]
        %v1362 = vld [vmem:[#allocation14 + $0x30] sm:$0xf]
        %v1363 = vld [vmem:[#allocation14 + $0x34] sm:$0xf]
        %v1364 = vld [vmem:[#allocation14 + $0x38] sm:$0xf]
        %v1365 = vld [vmem:[#allocation14 + $0x3c] sm:$0xf]
        %v1366 = vld [vmem:[#allocation14 + $0x40] sm:$0xf]
        %v1367 = vld [vmem:[#allocation14 + $0x44] sm:$0xf]
        %v1368 = vld [vmem:[#allocation14 + $0x48] sm:$0xf]
        %v1369 = vld [vmem:[#allocation14 + $0x4c] sm:$0xf]
        %v1370 = vld [vmem:[#allocation14 + $0x50] sm:$0xf]
        %v1371 = vld [vmem:[#allocation14 + $0x54] sm:$0xf]
        %v1372 = vld [vmem:[#allocation14 + $0x58] sm:$0xf]
        %v1373 = vld [vmem:[#allocation14 + $0x5c] sm:$0xf]
        %v1374 = vld [vmem:[#allocation14 + $0x60] sm:$0xf]
        %v1375 = vld [vmem:[#allocation14 + $0x64] sm:$0xf]
        %v1376 = vld [vmem:[#allocation14 + $0x68] sm:$0xf]
        %v1377 = vld [vmem:[#allocation14 + $0x6c] sm:$0xf]
        %v1378 = vld [vmem:[#allocation14 + $0x70] sm:$0xf]
        %v1379 = vld [vmem:[#allocation14 + $0x74] sm:$0xf]
        %v1380 = vld [vmem:[#allocation14 + $0x78] sm:$0xf]
        %v1381 = vld [vmem:[#allocation14 + $0x7c] sm:$0xf]
        %v1382 = vld [vmem:[%s10] sm:$0x1]
        %v1384 = vperm.slane %v1382, 0
        %v1418 = vunpack.c.l.b16 %v1350
        %v1419 = vunpack.c.l.b16 %v1351
        %v1420 = vunpack.c.l.b16 %v1352
        %v1421 = vunpack.c.l.b16 %v1353
        %v1422 = vunpack.c.l.b16 %v1354
        %v1423 = vunpack.c.l.b16 %v1355
        %v1424 = vunpack.c.l.b16 %v1356
        %v1425 = vunpack.c.l.b16 %v1357
        %v1426 = vunpack.c.l.b16 %v1358
        %v1427 = vunpack.c.l.b16 %v1359
        %v1428 = vunpack.c.l.b16 %v1360
        %v1429 = vunpack.c.l.b16 %v1361
        %v1430 = vunpack.c.l.b16 %v1362
        %v1431 = vunpack.c.l.b16 %v1363
        %v1432 = vunpack.c.l.b16 %v1364
        %v1433 = vunpack.c.l.b16 %v1365
        %v1434 = vunpack.c.l.b16 %v1366
        %v1435 = vunpack.c.l.b16 %v1367
        %v1436 = vunpack.c.l.b16 %v1368
        %v1437 = vunpack.c.l.b16 %v1369
        %v1438 = vunpack.c.l.b16 %v1370
        %v1439 = vunpack.c.l.b16 %v1371
        %v1440 = vunpack.c.l.b16 %v1372
        %v1441 = vunpack.c.l.b16 %v1373
        %v1442 = vunpack.c.l.b16 %v1374
        %v1443 = vunpack.c.l.b16 %v1375
        %v1444 = vunpack.c.l.b16 %v1376
        %v1445 = vunpack.c.l.b16 %v1377
        %v1446 = vunpack.c.l.b16 %v1378
        %v1447 = vunpack.c.l.b16 %v1379
        %v1448 = vunpack.c.l.b16 %v1380
        %v1449 = vunpack.c.l.b16 %v1381
        %v1450 = vpack.c.b16 %v1419, %v1418
        %v1451 = vpack.c.b16 %v1421, %v1420
        %v1452 = vpack.c.b16 %v1423, %v1422
        %v1453 = vpack.c.b16 %v1425, %v1424
        %v1454 = vpack.c.b16 %v1427, %v1426
        %v1455 = vpack.c.b16 %v1429, %v1428
        %v1456 = vpack.c.b16 %v1431, %v1430
        %v1457 = vpack.c.b16 %v1433, %v1432
        %v1458 = vpack.c.b16 %v1435, %v1434
        %v1459 = vpack.c.b16 %v1437, %v1436
        %v1460 = vpack.c.b16 %v1439, %v1438
        %v1461 = vpack.c.b16 %v1441, %v1440
        %v1462 = vpack.c.b16 %v1443, %v1442
        %v1463 = vpack.c.b16 %v1445, %v1444
        %v1464 = vpack.c.b16 %v1447, %v1446
        %v1465 = vpack.c.b16 %v1449, %v1448
        %1482 = vmatpush.bf16.msra.mxu0 %v1457
        %1483 = vmatpush.bf16.msra.mxu0 %v1456
        %1484 = vmatpush.bf16.msra.mxu0 %v1455
        %1485 = vmatpush.bf16.msra.mxu0 %v1454
        %1486 = vmatpush.bf16.msra.mxu0 %v1453
        %1487 = vmatpush.bf16.msra.mxu0 %v1452
        %1488 = vmatpush.bf16.msra.mxu0 %v1451
        %1489 = vmatpush.bf16.msra.mxu0 %v1450
        %1490 = vmatmul.bf16.gmra.mxu0 %v1346
        %v1491 = vpop.f32.mrf.mxu0
        %v1492 = vadd.f32 %v1384, %v1491
        %v1493 = vpop.f32.mrf.mxu0
        %v1494 = vadd.f32 %v1384, %v1493
        %1495 = vmatmul.bf16.gmra.mxu0 %v1348
        %v1496 = vpop.f32.mrf.mxu0
        %v1497 = vadd.f32 %v1384, %v1496
        %v1498 = vpop.f32.mrf.mxu0
        %v1499 = vadd.f32 %v1384, %v1498
        %1500 = vdwg.mxu0
        %1501 = vmatpush.bf16.msra.mxu0 %v1465
        %1502 = vmatpush.bf16.msra.mxu0 %v1464
        %1503 = vmatpush.bf16.msra.mxu0 %v1463
        %1504 = vmatpush.bf16.msra.mxu0 %v1462
        %1505 = vmatpush.bf16.msra.mxu0 %v1461
        %1506 = vmatpush.bf16.msra.mxu0 %v1460
        %1507 = vmatpush.bf16.msra.mxu0 %v1459
        %1508 = vmatpush.bf16.msra.mxu0 %v1458
        %1509 = vmatmul.bf16.gmra.mxu0 %v1347
        %v1510 = vpop.f32.mrf.mxu0
        %v1511 = vadd.f32 %v1492, %v1510
        %v1512 = vpop.f32.mrf.mxu0
        %v1513 = vadd.f32 %v1494, %v1512
        %1514 = vmatmul.bf16.gmra.mxu0 %v1349
        %v1515 = vpop.f32.mrf.mxu0
        %v1516 = vadd.f32 %v1497, %v1515
        %v1517 = vpop.f32.mrf.mxu0
        %v1518 = vadd.f32 %v1499, %v1517
        %1519 = vdwg.mxu0
        %v1520 = vld [vmem:[%s11] sm:$0x1]
        %v1522 = vperm.slane %v1520, 0
        %v1524 = vmul.f32 %v1511, %v1522
        %v1525 = vmul.f32 %v1513, %v1522
        %v1526 = vmul.f32 %v1516, %v1522
        %v1527 = vmul.f32 %v1518, %v1522
        %v1528 = vadd.f32 %v1524, %v721
        %v1529 = vadd.f32 %v1525, %v722
        %v1530 = vadd.f32 %v1526, %v723
        %v1531 = vadd.f32 %v1527, %v724
        %1532 = vst [vmem:[%s642] sm:$0xff] %v1528
        %1533 = vst [vmem:[%s642 + $0x8] sm:$0xff] %v1529
        %1534 = vst [vmem:[%s642 + $0x10] sm:$0xff] %v1530
        %1535 = vst [vmem:[%s642 + $0x18] sm:$0xff] %v1531
        %s1536 = sand.u32 %s355, 1
        %s1537 = scalar_lea.sflag [#allocation5], %s1536
        %s1538 = sand.u32 %s355, 1
        %s1539 = smul.addr %s1538, 32
        %s1540 = scalar_lea.vmem [#allocation15], %s1539
        // Predicated region
        $region105: #{tpu_custom_call.1} parent=67 // pred_check
          %p1541 = pneg %p365
        $region106: #{tpu_custom_call.1} parent=67 // pred_check_branch
          %1543 = sbr.rel (%p1541) target = $region108
        $region107: #{tpu_custom_call.1} parent=67 // pred_region
          %s1544 = smul.u32 4, %s39
          %1546 = vsyncadd %s1537, 0
          %s1547 = smul.addr %s38, 8
          %s1548 = sadd.s32 %s1544, %s1547
          %s1549 = smul.addr %s1548, 8
          %s1550 = scalar_lea.hbm %s12, %s1549
          %s1551 = sshll.u32 %s1540, 4
          %s1552 = int_to_ptr.vmem [resolvable:$true] %s1551
          %s1553 = sshll.u32 %s1550, 4
          %s1554 = int_to_ptr.hbm [resolvable:$true] %s1553
          %1559 = dma.vmem_to_hbm [thread:$0]  %s1552, 512, %s1554, %s1537, 128, 128, 8
        $region108: #{tpu_custom_call.1} parent=67 // pred_fallthru
          _
      $region68: #{tpu_custom_call.1} parent=5 // pred_fallthru
        _
      %p1560 = scmp.le.s32.totalorder 2, %s29
      // Predicated region
      $region109: #{tpu_custom_call.1} parent=5 // pred_check
        %p1561 = pneg %p1560
      $region110: #{tpu_custom_call.1} parent=5 // pred_check_branch
        %1563 = sbr.rel (%p1561) target = $region112
      $region111: #{tpu_custom_call.1} parent=5 // pred_region
        %s1564 = ssub.s32 %s29, 2
        // Predicated region
        $region113: #{tpu_custom_call.1} parent=111 // pred_check
          %p1565 = pneg %p371
        $region114: #{tpu_custom_call.1} parent=111 // pred_check_branch
          %1567 = sbr.rel (%p1565) target = $region116
        $region115: #{tpu_custom_call.1} parent=111 // pred_region
          %s1568 = sand.u32 %s356, 1
          %s1569 = scalar_lea.sflag [#allocation5], %s1568
          %s1570 = sand.u32 %s356, 1
          %s1571 = smul.addr %s1570, 32
          %s1572 = scalar_lea.vmem [#allocation15], %s1571
          %1574 = dma.done %s1569, 512
        $region116: #{tpu_custom_call.1} parent=111 // pred_fallthru
          _
      $region112: #{tpu_custom_call.1} parent=5 // pred_fallthru
        _
    $region6: #{tpu_custom_call.1} parent=1 // loop_footer
      %s33 = sadd.s32 1, %s29
    $region7: #{tpu_custom_call.1} parent=1 // loop_footer_branch
      %28 = sbr.rel target = $region3
    $region8: #{tpu_custom_call.1} parent=1 // loop_exit
      _
    %1575 = vsyncpa [#allocation4], 1
    %s1576 = scalar_lea.sflag [#allocation4], 1
    %1577 = vsyncpa %s1576, 1
    %1578 = vsyncpa [#allocation7], 1
    %s1579 = scalar_lea.sflag [#allocation7], 1
    %1580 = vsyncpa %s1579, 1
    %1581 = vsyncpa [#allocation10], 1
    %1582 = vsyncpa [#allocation13], 1
    %1583 = vsyncpa [#allocation5], 1
    %s1584 = scalar_lea.sflag [#allocation5], 1
    %1585 = vsyncpa %s1584, 1

</llo_original>
